<compile_context>
chip_gen: v7x
topology: tpu7x:2x2x1
jax: 0.10.0
libtpu: 0.0.40
codegen_flags: <defaults>
</compile_context>

<pallas_src>
import numpy as np
import jax
import jax.numpy as jnp
from jax.experimental import pallas as pl
from jax.experimental.pallas import tpu as pltpu


# ---------------------------------------------------------------------------
# HashGrid encoder (plain JAX — see TODO above)
# ---------------------------------------------------------------------------
_PRIMES = (np.uint32(1), np.uint32(2654435761), np.uint32(805459861))


def _level_geometry(num_levels, base_resolution, per_level_scale):
    """tcnn-style per-level grid scale / resolution."""
    scales, resolutions = [], []
    for lvl in range(num_levels):
        s = float(base_resolution) * (per_level_scale ** lvl) - 1.0
        r = int(np.ceil(s)) + 1
        scales.append(s)
        resolutions.append(r)
    return scales, resolutions


def _hash_grid_encode(x01, table, level_scales, level_resolutions, hashmap_size):
    """x01: (N, 3) in [0, 1]; table: (L, T, F) -> (N, L*F) float32."""
    num_levels, _, _ = table.shape
    offsets = np.array([[(c >> d) & 1 for d in range(3)] for c in range(8)],
                       dtype=np.uint32)                       # (8, 3) corner offsets
    offs_u = jnp.asarray(offsets)                             # uint32
    offs_f = jnp.asarray(offsets.astype(np.float32))          # float32

    feats = []
    for lvl in range(num_levels):
        scale = np.float32(level_scales[lvl])
        res = level_resolutions[lvl]

        pos = x01 * scale + np.float32(0.5)
        pos_floor = jnp.floor(pos)
        frac = pos - pos_floor                                # (N, 3)
        base = pos_floor.astype(jnp.uint32)                   # (N, 3)
        corner = base[:, None, :] + offs_u[None, :, :]        # (N, 8, 3)

        if res ** 3 <= hashmap_size:                          # dense level
            idx = (corner[..., 0]
                   + corner[..., 1] * np.uint32(res)
                   + corner[..., 2] * np.uint32(res * res))
        else:                                                 # hashed level
            idx = ((corner[..., 0] * _PRIMES[0])
                   ^ (corner[..., 1] * _PRIMES[1])
                   ^ (corner[..., 2] * _PRIMES[2]))
        idx = (idx & np.uint32(hashmap_size - 1)).astype(jnp.int32)   # (N, 8)

        corner_feat = table[lvl][idx]                         # (N, 8, F) gather
        w = jnp.where(offs_f[None, :, :] > 0.5,
                      frac[:, None, :], 1.0 - frac[:, None, :])
        w = jnp.prod(w, axis=-1)                              # (N, 8) trilinear weights
        feats.append(jnp.sum(corner_feat * w[..., None], axis=1))     # (N, F)

    return jnp.concatenate(feats, axis=-1)                    # (N, L*F) float32


def _posenc_window(min_deg, max_deg, alpha):
    bands = jnp.arange(min_deg, max_deg, dtype=jnp.float32)
    x = jnp.clip(alpha - bands, 0.0, 1.0)
    return 0.5 * (1.0 + jnp.cos(jnp.pi * x + jnp.pi))


# ---------------------------------------------------------------------------
# Fused Pallas kernel: MLP(32->128 ReLU ->3, window folded into W1)
#                      -> sigmoid*2-1
# ---------------------------------------------------------------------------
def _rgb_mlp_kernel(feat_ref, w1_ref, w2_ref, o_ref):
    x = feat_ref[...]                                                  # (T, 32) bf16
    h = jnp.dot(x, w1_ref[...], preferred_element_type=jnp.float32)    # (T, 128) f32 acc
    h = jnp.maximum(h, 0.0).astype(jnp.bfloat16)                       # bf16 for 2nd MXU pass
    y = jnp.dot(h, w2_ref[...], preferred_element_type=jnp.float32)    # (T, 3) f32 acc
    # sigmoid*2-1 in f32; exp + approx reciprocal both live on the EUP slot.
    s = 2.0 * pl.reciprocal(1.0 + jnp.exp(-y), approx=True) - 1.0
    o_ref[...] = s.astype(o_ref.dtype)


def _round_up(x, m):
    return ((x + m - 1) // m) * m


def _rgb_mlp_pallas(feat, w1_eff, w2, max_tile_rows=2048, min_grid_steps=4):
    """feat: (N, D_in) bf16, w1_eff: (D_in, H) bf16 (window folded in),
    w2: (H, D_out) bf16 -> (N, D_out) f32."""
    n, d_in = feat.shape
    d_hidden = w1_eff.shape[1]
    d_out = w2.shape[1]

    # Big-but-bounded tiles, rounded to the bf16 sublane pack (16), and a
    # multi-step grid whenever N allows (pipelining + v7x megacore sharding).
    tile = min(max_tile_rows, _round_up(n, 16))
    if n > 16 * min_grid_steps:
        tile = min(tile, max(16, _round_up(pl.cdiv(n, min_grid_steps), 16)))
    grid = (pl.cdiv(n, tile),)

    itemsize_feat = feat.dtype.itemsize
    cost = pl.CostEstimate(
        flops=2 * n * (d_in * d_hidden + d_hidden * d_out),
        transcendentals=n * d_out,
        bytes_accessed=(n * d_in * itemsize_feat + n * d_out * 4
                        + (d_in * d_hidden + d_hidden * d_out) * 2),
    )

    return pl.pallas_call(
        _rgb_mlp_kernel,
        out_shape=jax.ShapeDtypeStruct((n, d_out), jnp.float32),
        grid_spec=pltpu.PrefetchScalarGridSpec(
            num_scalar_prefetch=0,
            grid=grid,
            in_specs=[
                pl.BlockSpec((tile, d_in), lambda i: (i, 0)),        # features (streamed)
                pl.BlockSpec((d_in, d_hidden), lambda i: (0, 0)),    # W1 (resident)
                pl.BlockSpec((d_hidden, d_out), lambda i: (0, 0)),   # W2 (resident)
            ],
            out_specs=pl.BlockSpec((tile, d_out), lambda i: (i, 0)),
        ),
        compiler_params=pltpu.CompilerParams(
            dimension_semantics=("parallel",)),   # megacore-shardable on v7x
        cost_estimate=cost,
    )(feat, w1_eff, w2)


# ---------------------------------------------------------------------------
# ColorField module: params + forward
# ---------------------------------------------------------------------------
def make_color_field(key, num_layers=2, hidden_dim=128, num_levels=16,
                     n_features_per_level=2, bound=2, log2_hashmap_size=19,
                     table_init_scale=1e-1):
    # TODO(synk): fused kernel is specialized to num_layers == 2 (one hidden
    # layer), matching the module defaults.
    assert num_layers == 2, "fused kernel implements the default 2-layer MLP"

    per_level_scale = float(np.exp2(np.log2(2048 * bound / 16.0) / (16 - 1)))
    scales, resolutions = _level_geometry(num_levels, 16, per_level_scale)
    hashmap_size = 2 ** log2_hashmap_size
    encoder_dim = num_levels * n_features_per_level

    kt, k1, k2 = jax.random.split(key, 3)
    table = jax.random.uniform(kt, (num_levels, hashmap_size, n_features_per_level),
                               jnp.float32, -table_init_scale, table_init_scale)
    w1 = jax.random.normal(k1, (encoder_dim, hidden_dim), jnp.float32) \
        * np.float32(np.sqrt(2.0 / encoder_dim))
    w2 = jax.random.normal(k2, (hidden_dim, 3), jnp.float32) \
        * np.float32(np.sqrt(2.0 / hidden_dim))

    params = {"table": table, "w1": w1, "w2": w2}
    static = dict(bound=float(bound), encoder_dim=encoder_dim,
                  n_features_per_level=n_features_per_level,
                  scales=scales, resolutions=resolutions,
                  hashmap_size=hashmap_size)
    return params, static


def _make_window(static, alpha):
    d = static["encoder_dim"]
    if alpha is None:
        return jnp.ones((d,), jnp.float32)
    a = max(1.0, float(alpha))                             # concrete alpha, as in the module
    w = _posenc_window(0, d // 2, a)                       # (num_levels,)
    w = jnp.repeat(w, static["n_features_per_level"])      # repeat_interleave(·, 2)
    return w.astype(jnp.float32)                           # (d,)


def color_field_forward(params, static, inputs, alpha=None, max_tile_rows=2048):
    x = inputs[:, :3]
    x01 = (x + static["bound"]) / (2.0 * static["bound"])
    feat = _hash_grid_encode(x01, params["table"], static["scales"],
                             static["resolutions"], static["hashmap_size"])
    feat = feat.astype(jnp.bfloat16)                       # halve the dominant HBM stream
    win = _make_window(static, alpha)                      # (32,)
    # Fold the window into W1 (scales a tiny 32x128 weight once per call).
    w1_eff = (win[:, None] * params["w1"]).astype(jnp.bfloat16)
    w2 = params["w2"].astype(jnp.bfloat16)
    return _rgb_mlp_pallas(feat, w1_eff, w2, max_tile_rows=max_tile_rows)


# ---------------------------------------------------------------------------
# Pure-JAX f32 reference for the part implemented in Pallas
# ---------------------------------------------------------------------------
def color_field_reference(params, static, inputs, alpha=None):
    x = inputs[:, :3]
    x01 = (x + static["bound"]) / (2.0 * static["bound"])
    feat = _hash_grid_encode(x01, params["table"], static["scales"],
                             static["resolutions"], static["hashmap_size"])
    win = _make_window(static, alpha)
    h = jnp.maximum((feat * win[None, :]) @ params["w1"], 0.0)
    y = h @ params["w2"]
    return 2.0 / (1.0 + jnp.exp(-y)) - 1.0


# ---------------------------------------------------------------------------
# Demo / self-check
# ---------------------------------------------------------------------------
if __name__ == "__main__":
    key = jax.random.PRNGKey(0)
    kp, kx = jax.random.split(key, 2)

    params, static = make_color_field(kp)

    # N points with 3D coordinates in [-bound, bound], module-consistent.
    n_points = 2048
    x = jax.random.uniform(kx, (n_points, 3), jnp.float32,
                           minval=-static["bound"], maxval=static["bound"])

    # bf16 matmul path -> compare against the f32 reference with bf16-level
    # tolerances.
    TOL = dict(atol=2e-2, rtol=2e-2)

    # With coarse-to-fine window (alpha) — partially-open window.
    out = jax.block_until_ready(color_field_forward(params, static, x, alpha=8.5))
    ref = color_field_reference(params, static, x, alpha=8.5)
    assert out.shape == (n_points, 3)
    assert bool(jnp.all(jnp.isfinite(out)))
    assert jnp.allclose(out, ref, **TOL)

    # Without alpha (window disabled).
    out_na = jax.block_until_ready(color_field_forward(params, static, x))
    ref_na = color_field_reference(params, static, x)
    assert jnp.allclose(out_na, ref_na, **TOL)

    # Ragged N with multiple grid steps (exercises cdiv partial last block).
    x2 = x[:2000]
    out_r = jax.block_until_ready(
        color_field_forward(params, static, x2, alpha=8.5, max_tile_rows=512))
    ref_r = color_field_reference(params, static, x2, alpha=8.5)
    assert out_r.shape == (2000, 3)
    assert jnp.allclose(out_r, ref_r, **TOL)

    print("KERNEL_OK")
</pallas_src>

<mosaic_0001>
module attributes {stable_mosaic.version = 11 : i64} {
  func.func @_rgb_mlp_kernel(%arg0: i32, %arg1: memref<512x32xbf16, #tpu.memory_space<vmem>>, %arg2: memref<32x128xbf16, #tpu.memory_space<vmem>>, %arg3: memref<128x3xbf16, #tpu.memory_space<vmem>>, %arg4: memref<512x3xf32, #tpu.memory_space<vmem>>) attributes {dimension_semantics = [#tpu.dimension_semantics<parallel>], iteration_bounds = array<i64: 4>, scalar_prefetch = 0 : i64, scratch_operands = 0 : i64, tpu.core_type = #tpu.core_type<tc>, window_params = [{transform_indices = @transform_0, window_bounds = array<i64: 512, 32>}, {pipeline_mode = #tpu.pipeline_mode<synchronous>, transform_indices = @transform_1, window_bounds = array<i64: 32, 128>}, {pipeline_mode = #tpu.pipeline_mode<synchronous>, transform_indices = @transform_2, window_bounds = array<i64: 128, 3>}, {transform_indices = @transform_3, window_bounds = array<i64: 512, 3>}]} {
    %c0 = arith.constant 0 : index
    %c0_0 = arith.constant 0 : index
    %0 = vector.load %arg1[%c0, %c0_0] : memref<512x32xbf16, #tpu.memory_space<vmem>>, vector<512x32xbf16>
    %c0_1 = arith.constant 0 : index
    %c0_2 = arith.constant 0 : index
    %1 = vector.load %arg2[%c0_1, %c0_2] : memref<32x128xbf16, #tpu.memory_space<vmem>>, vector<32x128xbf16>
    %cst = arith.constant dense<0.000000e+00> : vector<512x128xf32>
    %2 = tpu.matmul %0, %1, %cst {dimension_numbers = #tpu.dot_dimension_numbers<[1], [0], [0], [1], [0, 0, 1, 1], [], []>} : vector<512x32xbf16>, vector<32x128xbf16>, vector<512x128xf32> -> vector<512x128xf32>
    %cst_3 = arith.constant 0.000000e+00 : f32
    %3 = vector.broadcast %cst_3 : f32 to vector<512x128xf32>
    %4 = arith.maximumf %2, %3 : vector<512x128xf32>
    %5 = arith.truncf %4 : vector<512x128xf32> to vector<512x128xbf16>
    %c0_4 = arith.constant 0 : index
    %c0_5 = arith.constant 0 : index
    %6 = vector.load %arg3[%c0_4, %c0_5] : memref<128x3xbf16, #tpu.memory_space<vmem>>, vector<128x3xbf16>
    %cst_6 = arith.constant dense<0.000000e+00> : vector<512x3xf32>
    %7 = tpu.matmul %5, %6, %cst_6 {dimension_numbers = #tpu.dot_dimension_numbers<[1], [0], [0], [1], [0, 0, 1, 1], [], []>} : vector<512x128xbf16>, vector<128x3xbf16>, vector<512x3xf32> -> vector<512x3xf32>
    %cst_7 = arith.constant 0.000000e+00 : f32
    %8 = vector.broadcast %cst_7 : f32 to vector<512x3xf32>
    %9 = arith.subf %8, %7 : vector<512x3xf32>
    %10 = math.exp %9 : vector<512x3xf32>
    %cst_8 = arith.constant 1.000000e+00 : f32
    %11 = vector.broadcast %cst_8 : f32 to vector<512x3xf32>
    %12 = arith.addf %11, %10 : vector<512x3xf32>
    %13 = tpu.reciprocal %12 {approx = true} : vector<512x3xf32> -> vector<512x3xf32>
    %cst_9 = arith.constant 2.000000e+00 : f32
    %14 = vector.broadcast %cst_9 : f32 to vector<512x3xf32>
    %15 = arith.mulf %14, %13 : vector<512x3xf32>
    %cst_10 = arith.constant 1.000000e+00 : f32
    %16 = vector.broadcast %cst_10 : f32 to vector<512x3xf32>
    %17 = arith.subf %15, %16 : vector<512x3xf32>
    %c0_11 = arith.constant 0 : index
    %c0_12 = arith.constant 0 : index
    %18 = vector.load %arg4[%c0_11, %c0_12] : memref<512x3xf32, #tpu.memory_space<vmem>>, vector<512x3xf32>
    tpu.vector_store %arg4[%c0_11, %c0_12], %17 {strides = array<i32>} : memref<512x3xf32, #tpu.memory_space<vmem>>, vector<512x3xf32>,
    return
  }
  func.func @transform_0(%arg0: i32) -> (i32, i32) {
    %c0_i32 = arith.constant 0 : i32
    %c0_i32_0 = arith.constant 0 : i32
    return %arg0, %c0_i32 : i32, i32
  }
  func.func @transform_1(%arg0: i32) -> (i32, i32) {
    %c0_i32 = arith.constant 0 : i32
    %c0_i32_0 = arith.constant 0 : i32
    %c0_i32_1 = arith.constant 0 : i32
    return %c0_i32, %c0_i32_0 : i32, i32
  }
  func.func @transform_2(%arg0: i32) -> (i32, i32) {
    %c0_i32 = arith.constant 0 : i32
    %c0_i32_0 = arith.constant 0 : i32
    %c0_i32_1 = arith.constant 0 : i32
    return %c0_i32, %c0_i32_0 : i32, i32
  }
  func.func @transform_3(%arg0: i32) -> (i32, i32) {
    %c0_i32 = arith.constant 0 : i32
    %c0_i32_0 = arith.constant 0 : i32
    return %arg0, %c0_i32 : i32, i32
  }
}

</mosaic_0001>

<llo_original>
// kernel: tpu_custom_call.1
$region0: #{tpu_custom_call.1}
  #allocation0 [shape = 'u32[]', space=smem, size = 0x4, offset = 0x4, fixed_abs, tag = 'smem constant byte address 0x4 - core index']
  #allocation1 [shape = 'u32[144,128]{1,0:T(1,128)}', space=vmem, size = 0x12000, scoped, tag = 'internal scratch']
  %s0 = inlined_call_operand.vmem [shape: bf16[2048,32], index: 0, kind: input, shape index: {}]
  %s1 = inlined_call_operand.vmem [shape: bf16[32,128], index: 1, kind: input, shape index: {}]
  %s2 = inlined_call_operand.vmem [shape: bf16[128,3], index: 2, kind: input, shape index: {}]
  %s3 = inlined_call_operand.vmem [shape: f32[2048,3], index: 3, kind: output, shape index: {}]
  %s4 = sld [smem:[#allocation0]]
  $region45: #{tpu_custom_call.1} parent=0
    _
  %s6 = ssub.s32 1, %s4
  %s7 = scalar_select 0, %s6, %s4
  loop: start=0, step=1, limit=6
  $region2: #{tpu_custom_call.1} parent=0 // loop_pre_header
    _
  $region3: #{tpu_custom_call.1} parent=0 // loop_header
    %s9 = sphi 0, %s13
    %p10 = scmp.ge.s32.totalorder %s9, 6
    %s19 = sphi 0, %s21
    %s22 = sphi 0, %s19
    %s23 = sphi 0, %s22
    %s39 = sphi 0, %s23
    %s43 = sphi 0, %s43
    %s45 = sphi 0, %s43
    %s46 = sphi 0, %s45
    %s60 = sphi 0, %s46
    %s64 = sphi 0, %s64
    %s66 = sphi 0, %s64
    %s67 = sphi 0, %s66
    %s81 = sphi 0, %s67
    %s87 = sphi 0, %s89
    %s90 = sphi 0, %s87
    %s91 = sphi 0, %s90
    %s107 = sphi 0, %s91
  $region4: #{tpu_custom_call.1} parent=0 // loop_header_branch
    %12 = sbr.rel (%p10) target = $region8
  $region5: #{tpu_custom_call.1} parent=0 // loop_body
    %s14 = ssub.s32 %s9, 1
    %s15 = ssub.s32 %s9, 2
    %s16 = sadd.s32 %s9, 1
    %s17 = ssub.s32 %s9, %s16
    %p18 = scmp.eq.s32.totalorder %s17, 0
    %s20 = sadd.s32 %s19, 1
    %s21 = scalar_select %p18, %s19, %s20
    %p24 = pneg %p18
    %p25 = scmp.eq.s32.totalorder %s9, 3
    %p26 = por %p24, %p25
    %p27 = scmp.ne.s32.totalorder %s19, %s22
    %p28 = scmp.eq.s32.totalorder %s9, 0
    %p29 = por %p27, %p28
    %p30 = scmp.ne.s32.totalorder %s19, %s22
    %p31 = scmp.eq.s32.totalorder %s14, 3
    %p32 = por %p30, %p31
    %p33 = scmp.ne.s32.totalorder %s22, %s23
    %p34 = scmp.eq.s32.totalorder %s14, 0
    %p35 = por %p33, %p34
    %p36 = scmp.ne.s32.totalorder %s22, %s23
    %p37 = scmp.eq.s32.totalorder %s15, 3
    %p38 = por %p36, %p37
    %p40 = scmp.ne.s32.totalorder %s23, %s39
    %p41 = scmp.eq.s32.totalorder %s15, 0
    %p42 = por %p40, %p41
    %s44 = sadd.s32 %s43, 1
    %p47 = scmp.eq.s32.totalorder %s9, 3
    %p48 = scmp.ne.s32.totalorder %s43, %s45
    %p49 = scmp.eq.s32.totalorder %s9, 0
    %p50 = por %p48, %p49
    %p51 = scmp.ne.s32.totalorder %s43, %s45
    %p52 = scmp.eq.s32.totalorder %s14, 3
    %p53 = por %p51, %p52
    %p54 = scmp.ne.s32.totalorder %s45, %s46
    %p55 = scmp.eq.s32.totalorder %s14, 0
    %p56 = por %p54, %p55
    %p57 = scmp.ne.s32.totalorder %s45, %s46
    %p58 = scmp.eq.s32.totalorder %s15, 3
    %p59 = por %p57, %p58
    %p61 = scmp.ne.s32.totalorder %s46, %s60
    %p62 = scmp.eq.s32.totalorder %s15, 0
    %p63 = por %p61, %p62
    %s65 = sadd.s32 %s64, 1
    %p68 = scmp.eq.s32.totalorder %s9, 3
    %p69 = scmp.ne.s32.totalorder %s64, %s66
    %p70 = scmp.eq.s32.totalorder %s9, 0
    %p71 = por %p69, %p70
    %p72 = scmp.ne.s32.totalorder %s64, %s66
    %p73 = scmp.eq.s32.totalorder %s14, 3
    %p74 = por %p72, %p73
    %p75 = scmp.ne.s32.totalorder %s66, %s67
    %p76 = scmp.eq.s32.totalorder %s14, 0
    %p77 = por %p75, %p76
    %p78 = scmp.ne.s32.totalorder %s66, %s67
    %p79 = scmp.eq.s32.totalorder %s15, 3
    %p80 = por %p78, %p79
    %p82 = scmp.ne.s32.totalorder %s67, %s81
    %p83 = scmp.eq.s32.totalorder %s15, 0
    %p84 = por %p82, %p83
    %s85 = ssub.s32 %s9, %s16
    %p86 = scmp.eq.s32.totalorder %s85, 0
    %s88 = sadd.s32 %s87, 1
    %s89 = scalar_select %p86, %s87, %s88
    %p92 = pneg %p86
    %p93 = scmp.eq.s32.totalorder %s9, 3
    %p94 = por %p92, %p93
    %p95 = scmp.ne.s32.totalorder %s87, %s90
    %p96 = scmp.eq.s32.totalorder %s9, 0
    %p97 = por %p95, %p96
    %p98 = scmp.ne.s32.totalorder %s87, %s90
    %p99 = scmp.eq.s32.totalorder %s14, 3
    %p100 = por %p98, %p99
    %p101 = scmp.ne.s32.totalorder %s90, %s91
    %p102 = scmp.eq.s32.totalorder %s14, 0
    %p103 = por %p101, %p102
    %p104 = scmp.ne.s32.totalorder %s90, %s91
    %p105 = scmp.eq.s32.totalorder %s15, 3
    %p106 = por %p104, %p105
    %p108 = scmp.ne.s32.totalorder %s91, %s107
    %p109 = scmp.eq.s32.totalorder %s15, 0
    %p110 = por %p108, %p109
    %p111 = scmp.le.s32.totalorder 1, %s9
    %p112 = scmp.lt.s32.totalorder %s9, 5
    %p113 = pnand %p111, %p112
    %p114 = pneg %p113
    // Predicated region
    $region9: #{tpu_custom_call.1} parent=5 // pred_check
      _
    $region10: #{tpu_custom_call.1} parent=5 // pred_check_branch
      %116 = sbr.rel (%p113) target = $region12
    $region11: #{tpu_custom_call.1} parent=5 // pred_region
      %s117 = ssub.s32 %s9, 1
      // Predicated region
      $region13: #{tpu_custom_call.1} parent=11 // pred_check
        %p118 = pneg %p56
      $region14: #{tpu_custom_call.1} parent=11 // pred_check_branch
        %120 = sbr.rel (%p118) target = $region16
      $region15: #{tpu_custom_call.1} parent=11 // pred_region
        _
      $region16: #{tpu_custom_call.1} parent=11 // pred_fallthru
        _
      // Predicated region
      $region17: #{tpu_custom_call.1} parent=11 // pred_check
        %p121 = pneg %p77
      $region18: #{tpu_custom_call.1} parent=11 // pred_check_branch
        %123 = sbr.rel (%p121) target = $region20
      $region19: #{tpu_custom_call.1} parent=11 // pred_region
        _
      $region20: #{tpu_custom_call.1} parent=11 // pred_fallthru
        _
    $region12: #{tpu_custom_call.1} parent=5 // pred_fallthru
      _
    %p124 = scmp.lt.s32.totalorder %s9, 4
    // Predicated region
    $region21: #{tpu_custom_call.1} parent=5 // pred_check
      %p125 = pneg %p124
    $region22: #{tpu_custom_call.1} parent=5 // pred_check_branch
      %127 = sbr.rel (%p125) target = $region24
    $region23: #{tpu_custom_call.1} parent=5 // pred_region
      // Predicated region
      $region25: #{tpu_custom_call.1} parent=23 // pred_check
        %p128 = pneg %p29
      $region26: #{tpu_custom_call.1} parent=23 // pred_check_branch
        %130 = sbr.rel (%p128) target = $region28
      $region27: #{tpu_custom_call.1} parent=23 // pred_region
        %s131 = smul.u32 64, %s9
        %p132 = scmp.lt.s32.totalorder %s131, 255
        %s133 = scalar_select %p132, %s131, 255
        %s134 = smul.addr %s133, 4
        %s135 = scalar_lea.vmem %s0, %s134
        %s136 = smul.u32 64, %s9
      $region28: #{tpu_custom_call.1} parent=23 // pred_fallthru
        _
    $region24: #{tpu_custom_call.1} parent=5 // pred_fallthru
      _
    %p137 = scmp.le.s32.totalorder 1, %s9
    %p138 = scmp.lt.s32.totalorder %s9, 5
    %p139 = pnand %p137, %p138
    %p140 = pneg %p139
    // Predicated region
    $region29: #{tpu_custom_call.1} parent=5 // pred_check
      _
    $region30: #{tpu_custom_call.1} parent=5 // pred_check_branch
      %142 = sbr.rel (%p139) target = $region32
    $region31: #{tpu_custom_call.1} parent=5 // pred_region
      %s143 = ssub.s32 %s9, 1
      %s144 = smul.u32 64, %s14
      %p145 = scmp.lt.s32.totalorder %s144, 255
      %s146 = scalar_select %p145, %s144, 255
      %s147 = smul.addr %s146, 4
      %s148 = scalar_lea.vmem %s0, %s147
      %p149 = pneg %p35
      %p150 = pneg %p32
      %p151 = pneg %p56
      %p152 = pneg %p53
      %p153 = pneg %p77
      %p154 = pneg %p74
      %p155 = pneg %p103
      %p156 = pneg %p100
      %s157 = smul.u32 64, %s14
      %p158 = scmp.lt.s32.totalorder %s157, 255
      %s159 = scalar_select %p158, %s157, 255
      %s160 = smul.addr %s159, 8
      %s161 = scalar_lea.vmem %s3, %s160
      %s162 = smul.u32 64, %s14
      %p163 = scmp.lt.s32.totalorder %s162, 255
      %s164 = scalar_select %p163, %s162, 255
      %s165 = smul.addr %s164, 4
      %s166 = scalar_lea.vmem %s0, %s165
      %s167 = smul.u32 64, %s14
      %s168 = smul.u32 64, %s14
      %p169 = scmp.lt.s32.totalorder %s168, 255
      %s170 = scalar_select %p169, %s168, 255
      %s171 = smul.addr %s170, 8
      %s172 = scalar_lea.vmem %s3, %s171
      %s173 = smul.u32 64, %s14
      %v175 = vld [vmem:[%s166] sm:$0xf]
      %v176 = vld [vmem:[%s166 + $0x4] sm:$0xf]
      %v177 = vld [vmem:[%s166 + $0x8] sm:$0xf]
      %v178 = vld [vmem:[%s166 + $0xc] sm:$0xf]
      %v179 = vld [vmem:[%s166 + $0x10] sm:$0xf]
      %v180 = vld [vmem:[%s166 + $0x14] sm:$0xf]
      %v181 = vld [vmem:[%s166 + $0x18] sm:$0xf]
      %v182 = vld [vmem:[%s166 + $0x1c] sm:$0xf]
      %v183 = vld [vmem:[%s166 + $0x20] sm:$0xf]
      %v184 = vld [vmem:[%s166 + $0x24] sm:$0xf]
      %v185 = vld [vmem:[%s166 + $0x28] sm:$0xf]
      %v186 = vld [vmem:[%s166 + $0x2c] sm:$0xf]
      %v187 = vld [vmem:[%s166 + $0x30] sm:$0xf]
      %v188 = vld [vmem:[%s166 + $0x34] sm:$0xf]
      %v189 = vld [vmem:[%s166 + $0x38] sm:$0xf]
      %v190 = vld [vmem:[%s166 + $0x3c] sm:$0xf]
      %v191 = vld [vmem:[%s166 + $0x40] sm:$0xf]
      %v192 = vld [vmem:[%s166 + $0x44] sm:$0xf]
      %v193 = vld [vmem:[%s166 + $0x48] sm:$0xf]
      %v194 = vld [vmem:[%s166 + $0x4c] sm:$0xf]
      %v195 = vld [vmem:[%s166 + $0x50] sm:$0xf]
      %v196 = vld [vmem:[%s166 + $0x54] sm:$0xf]
      %v197 = vld [vmem:[%s166 + $0x58] sm:$0xf]
      %v198 = vld [vmem:[%s166 + $0x5c] sm:$0xf]
      %v199 = vld [vmem:[%s166 + $0x60] sm:$0xf]
      %v200 = vld [vmem:[%s166 + $0x64] sm:$0xf]
      %v201 = vld [vmem:[%s166 + $0x68] sm:$0xf]
      %v202 = vld [vmem:[%s166 + $0x6c] sm:$0xf]
      %v203 = vld [vmem:[%s166 + $0x70] sm:$0xf]
      %v204 = vld [vmem:[%s166 + $0x74] sm:$0xf]
      %v205 = vld [vmem:[%s166 + $0x78] sm:$0xf]
      %v206 = vld [vmem:[%s166 + $0x7c] sm:$0xf]
      %v207 = vld [vmem:[%s166 + $0x80] sm:$0xf]
      %v208 = vld [vmem:[%s166 + $0x84] sm:$0xf]
      %v209 = vld [vmem:[%s166 + $0x88] sm:$0xf]
      %v210 = vld [vmem:[%s166 + $0x8c] sm:$0xf]
      %v211 = vld [vmem:[%s166 + $0x90] sm:$0xf]
      %v212 = vld [vmem:[%s166 + $0x94] sm:$0xf]
      %v213 = vld [vmem:[%s166 + $0x98] sm:$0xf]
      %v214 = vld [vmem:[%s166 + $0x9c] sm:$0xf]
      %v215 = vld [vmem:[%s166 + $0xa0] sm:$0xf]
      %v216 = vld [vmem:[%s166 + $0xa4] sm:$0xf]
      %v217 = vld [vmem:[%s166 + $0xa8] sm:$0xf]
      %v218 = vld [vmem:[%s166 + $0xac] sm:$0xf]
      %v219 = vld [vmem:[%s166 + $0xb0] sm:$0xf]
      %v220 = vld [vmem:[%s166 + $0xb4] sm:$0xf]
      %v221 = vld [vmem:[%s166 + $0xb8] sm:$0xf]
      %v222 = vld [vmem:[%s166 + $0xbc] sm:$0xf]
      %v223 = vld [vmem:[%s166 + $0xc0] sm:$0xf]
      %v224 = vld [vmem:[%s166 + $0xc4] sm:$0xf]
      %v225 = vld [vmem:[%s166 + $0xc8] sm:$0xf]
      %v226 = vld [vmem:[%s166 + $0xcc] sm:$0xf]
      %v227 = vld [vmem:[%s166 + $0xd0] sm:$0xf]
      %v228 = vld [vmem:[%s166 + $0xd4] sm:$0xf]
      %v229 = vld [vmem:[%s166 + $0xd8] sm:$0xf]
      %v230 = vld [vmem:[%s166 + $0xdc] sm:$0xf]
      %v231 = vld [vmem:[%s166 + $0xe0] sm:$0xf]
      %v232 = vld [vmem:[%s166 + $0xe4] sm:$0xf]
      %v233 = vld [vmem:[%s166 + $0xe8] sm:$0xf]
      %v234 = vld [vmem:[%s166 + $0xec] sm:$0xf]
      %v235 = vld [vmem:[%s166 + $0xf0] sm:$0xf]
      %v236 = vld [vmem:[%s166 + $0xf4] sm:$0xf]
      %v237 = vld [vmem:[%s166 + $0xf8] sm:$0xf]
      %v238 = vld [vmem:[%s166 + $0xfc] sm:$0xf]
      %v239 = vld [vmem:[%s1] sm:$0xf]
      %v240 = vld [vmem:[%s1 + $0x4] sm:$0xf]
      %v241 = vld [vmem:[%s1 + $0x8] sm:$0xf]
      %v242 = vld [vmem:[%s1 + $0xc] sm:$0xf]
      %v307 = vunpack.c.l.b16 %v175
      %v308 = vunpack.c.l.b16 %v176
      %v309 = vunpack.c.l.b16 %v177
      %v310 = vunpack.c.l.b16 %v178
      %v311 = vunpack.c.l.b16 %v179
      %v312 = vunpack.c.l.b16 %v180
      %v313 = vunpack.c.l.b16 %v181
      %v314 = vunpack.c.l.b16 %v182
      %v315 = vunpack.c.l.b16 %v183
      %v316 = vunpack.c.l.b16 %v184
      %v317 = vunpack.c.l.b16 %v185
      %v318 = vunpack.c.l.b16 %v186
      %v319 = vunpack.c.l.b16 %v187
      %v320 = vunpack.c.l.b16 %v188
      %v321 = vunpack.c.l.b16 %v189
      %v322 = vunpack.c.l.b16 %v190
      %v323 = vunpack.c.l.b16 %v191
      %v324 = vunpack.c.l.b16 %v192
      %v325 = vunpack.c.l.b16 %v193
      %v326 = vunpack.c.l.b16 %v194
      %v327 = vunpack.c.l.b16 %v195
      %v328 = vunpack.c.l.b16 %v196
      %v329 = vunpack.c.l.b16 %v197
      %v330 = vunpack.c.l.b16 %v198
      %v331 = vunpack.c.l.b16 %v199
      %v332 = vunpack.c.l.b16 %v200
      %v333 = vunpack.c.l.b16 %v201
      %v334 = vunpack.c.l.b16 %v202
      %v335 = vunpack.c.l.b16 %v203
      %v336 = vunpack.c.l.b16 %v204
      %v337 = vunpack.c.l.b16 %v205
      %v338 = vunpack.c.l.b16 %v206
      %v339 = vunpack.c.l.b16 %v207
      %v340 = vunpack.c.l.b16 %v208
      %v341 = vunpack.c.l.b16 %v209
      %v342 = vunpack.c.l.b16 %v210
      %v343 = vunpack.c.l.b16 %v211
      %v344 = vunpack.c.l.b16 %v212
      %v345 = vunpack.c.l.b16 %v213
      %v346 = vunpack.c.l.b16 %v214
      %v347 = vunpack.c.l.b16 %v215
      %v348 = vunpack.c.l.b16 %v216
      %v349 = vunpack.c.l.b16 %v217
      %v350 = vunpack.c.l.b16 %v218
      %v351 = vunpack.c.l.b16 %v219
      %v352 = vunpack.c.l.b16 %v220
      %v353 = vunpack.c.l.b16 %v221
      %v354 = vunpack.c.l.b16 %v222
      %v355 = vunpack.c.l.b16 %v223
      %v356 = vunpack.c.l.b16 %v224
      %v357 = vunpack.c.l.b16 %v225
      %v358 = vunpack.c.l.b16 %v226
      %v359 = vunpack.c.l.b16 %v227
      %v360 = vunpack.c.l.b16 %v228
      %v361 = vunpack.c.l.b16 %v229
      %v362 = vunpack.c.l.b16 %v230
      %v363 = vunpack.c.l.b16 %v231
      %v364 = vunpack.c.l.b16 %v232
      %v365 = vunpack.c.l.b16 %v233
      %v366 = vunpack.c.l.b16 %v234
      %v367 = vunpack.c.l.b16 %v235
      %v368 = vunpack.c.l.b16 %v236
      %v369 = vunpack.c.l.b16 %v237
      %v370 = vunpack.c.l.b16 %v238
      %v371 = vpack.c.b16 %v308, %v307
      %v372 = vpack.c.b16 %v310, %v309
      %v373 = vpack.c.b16 %v312, %v311
      %v374 = vpack.c.b16 %v314, %v313
      %v375 = vpack.c.b16 %v316, %v315
      %v376 = vpack.c.b16 %v318, %v317
      %v377 = vpack.c.b16 %v320, %v319
      %v378 = vpack.c.b16 %v322, %v321
      %v379 = vpack.c.b16 %v324, %v323
      %v380 = vpack.c.b16 %v326, %v325
      %v381 = vpack.c.b16 %v328, %v327
      %v382 = vpack.c.b16 %v330, %v329
      %v383 = vpack.c.b16 %v332, %v331
      %v384 = vpack.c.b16 %v334, %v333
      %v385 = vpack.c.b16 %v336, %v335
      %v386 = vpack.c.b16 %v338, %v337
      %v387 = vpack.c.b16 %v340, %v339
      %v388 = vpack.c.b16 %v342, %v341
      %v389 = vpack.c.b16 %v344, %v343
      %v390 = vpack.c.b16 %v346, %v345
      %v391 = vpack.c.b16 %v348, %v347
      %v392 = vpack.c.b16 %v350, %v349
      %v393 = vpack.c.b16 %v352, %v351
      %v394 = vpack.c.b16 %v354, %v353
      %v395 = vpack.c.b16 %v356, %v355
      %v396 = vpack.c.b16 %v358, %v357
      %v397 = vpack.c.b16 %v360, %v359
      %v398 = vpack.c.b16 %v362, %v361
      %v399 = vpack.c.b16 %v364, %v363
      %v400 = vpack.c.b16 %v366, %v365
      %v401 = vpack.c.b16 %v368, %v367
      %v402 = vpack.c.b16 %v370, %v369
      %v407 = vunpack.c.l.b16 %v239
      %v408 = vunpack.c.l.b16 %v240
      %v409 = vunpack.c.l.b16 %v241
      %v410 = vunpack.c.l.b16 %v242
      %v411 = vpack.c.b16 %v408, %v407
      %v412 = vpack.c.b16 %v410, %v409
      %vm415 = vcmask 261120
      %v417 = vsel %vm415, %v371, 0
      %v420 = vsel %vm415, %v372, 0
      %v423 = vsel %vm415, %v373, 0
      %v426 = vsel %vm415, %v374, 0
      %v429 = vsel %vm415, %v375, 0
      %v432 = vsel %vm415, %v376, 0
      %v435 = vsel %vm415, %v377, 0
      %v438 = vsel %vm415, %v378, 0
      %v441 = vsel %vm415, %v379, 0
      %v444 = vsel %vm415, %v380, 0
      %v447 = vsel %vm415, %v381, 0
      %v450 = vsel %vm415, %v382, 0
      %v453 = vsel %vm415, %v383, 0
      %v456 = vsel %vm415, %v384, 0
      %v459 = vsel %vm415, %v385, 0
      %v462 = vsel %vm415, %v386, 0
      %v465 = vsel %vm415, %v387, 0
      %v468 = vsel %vm415, %v388, 0
      %v471 = vsel %vm415, %v389, 0
      %v474 = vsel %vm415, %v390, 0
      %v477 = vsel %vm415, %v391, 0
      %v480 = vsel %vm415, %v392, 0
      %v483 = vsel %vm415, %v393, 0
      %v486 = vsel %vm415, %v394, 0
      %v489 = vsel %vm415, %v395, 0
      %v492 = vsel %vm415, %v396, 0
      %v495 = vsel %vm415, %v397, 0
      %v498 = vsel %vm415, %v398, 0
      %v501 = vsel %vm415, %v399, 0
      %v504 = vsel %vm415, %v400, 0
      %v507 = vsel %vm415, %v401, 0
      %v510 = vsel %vm415, %v402, 0
      %512 = vmatprep.subr.bf16.mxu0 0
      %513 = vmatpush1.bf16.msra.mxu0 %v411
      %514 = vmatprep.subr.bf16.mxu0 0
      %515 = vmatpush1.bf16.msra.mxu0 %v412
      %516 = vmatprep.subr.bf16.mxu0 0
      %517 = vmatpush1.bf16.msra.mxu0 0
      %518 = vmatprep.subr.bf16.mxu0 0
      %519 = vmatpush1.bf16.msra.mxu0 0
      %520 = vmatprep.subr.bf16.mxu0 0
      %521 = vmatpush1.bf16.msra.mxu0 0
      %522 = vmatprep.subr.bf16.mxu0 0
      %523 = vmatpush1.bf16.msra.mxu0 0
      %524 = vmatprep.subr.bf16.mxu0 0
      %525 = vmatpush1.bf16.msra.mxu0 0
      %526 = vmatprep.subr.bf16.mxu0 0
      %527 = vmatpush1.bf16.msra.mxu0 0
      %528 = vmatprep.subr.bf16.mxu0 0
      %529 = vmatpush1.bf16.msra.mxu0 0
      %530 = vmatprep.subr.bf16.mxu0 0
      %531 = vmatpush1.bf16.msra.mxu0 0
      %532 = vmatprep.subr.bf16.mxu0 0
      %533 = vmatpush1.bf16.msra.mxu0 0
      %534 = vmatprep.subr.bf16.mxu0 0
      %535 = vmatpush1.bf16.msra.mxu0 0
      %536 = vmatprep.subr.bf16.mxu0 0
      %537 = vmatpush1.bf16.msra.mxu0 0
      %538 = vmatprep.subr.bf16.mxu0 0
      %539 = vmatpush1.bf16.msra.mxu0 0
      %540 = vmatprep.subr.bf16.mxu0 0
      %541 = vmatpush1.bf16.msra.mxu0 0
      %542 = vmatprep.subr.bf16.mxu0 0
      %543 = vmatpush1.bf16.msra.mxu0 0
      %544 = vmatprep.mubr.bf16.mxu0 0
      %545 = vmatmul.mubr.bf16.gmra.mrb[0].mxu0 %v417
      %v546 = vpop.f32.mrb[0].mxu0
      %v547 = vadd.f32 0.0, %v546
      %v548 = vpop.f32.mrb[0].mxu0
      %v549 = vpop.f32.mrb[0].mxu0
      %v550 = vadd.f32 0.0, %v549
      %v551 = vpop.f32.mrb[0].mxu0
      %552 = vmatprep.mubr.bf16.mxu0 0
      %553 = vmatmul.mubr.bf16.gmra.mrb[0].mxu0 %v420
      %v554 = vpop.f32.mrb[0].mxu0
      %v555 = vadd.f32 0.0, %v554
      %v556 = vpop.f32.mrb[0].mxu0
      %v557 = vpop.f32.mrb[0].mxu0
      %v558 = vadd.f32 0.0, %v557
      %v559 = vpop.f32.mrb[0].mxu0
      %560 = vmatprep.mubr.bf16.mxu0 0
      %561 = vmatmul.mubr.bf16.gmra.mrb[0].mxu0 %v423
      %v562 = vpop.f32.mrb[0].mxu0
      %v563 = vadd.f32 0.0, %v562
      %v564 = vpop.f32.mrb[0].mxu0
      %v565 = vpop.f32.mrb[0].mxu0
      %v566 = vadd.f32 0.0, %v565
      %v567 = vpop.f32.mrb[0].mxu0
      %568 = vmatprep.mubr.bf16.mxu0 0
      %569 = vmatmul.mubr.bf16.gmra.mrb[0].mxu0 %v426
      %v570 = vpop.f32.mrb[0].mxu0
      %v571 = vadd.f32 0.0, %v570
      %v572 = vpop.f32.mrb[0].mxu0
      %v573 = vpop.f32.mrb[0].mxu0
      %v574 = vadd.f32 0.0, %v573
      %v575 = vpop.f32.mrb[0].mxu0
      %576 = vmatprep.mubr.bf16.mxu0 0
      %577 = vmatmul.mubr.bf16.gmra.mrb[0].mxu0 %v429
      %v578 = vpop.f32.mrb[0].mxu0
      %v579 = vadd.f32 0.0, %v578
      %v580 = vpop.f32.mrb[0].mxu0
      %v581 = vpop.f32.mrb[0].mxu0
      %v582 = vadd.f32 0.0, %v581
      %v583 = vpop.f32.mrb[0].mxu0
      %584 = vmatprep.mubr.bf16.mxu0 0
      %585 = vmatmul.mubr.bf16.gmra.mrb[0].mxu0 %v432
      %v586 = vpop.f32.mrb[0].mxu0
      %v587 = vadd.f32 0.0, %v586
      %v588 = vpop.f32.mrb[0].mxu0
      %v589 = vpop.f32.mrb[0].mxu0
      %v590 = vadd.f32 0.0, %v589
      %v591 = vpop.f32.mrb[0].mxu0
      %592 = vmatprep.mubr.bf16.mxu0 0
      %593 = vmatmul.mubr.bf16.gmra.mrb[0].mxu0 %v435
      %v594 = vpop.f32.mrb[0].mxu0
      %v595 = vadd.f32 0.0, %v594
      %v596 = vpop.f32.mrb[0].mxu0
      %v597 = vpop.f32.mrb[0].mxu0
      %v598 = vadd.f32 0.0, %v597
      %v599 = vpop.f32.mrb[0].mxu0
      %600 = vmatprep.mubr.bf16.mxu0 0
      %601 = vmatmul.mubr.bf16.gmra.mrb[0].mxu0 %v438
      %v602 = vpop.f32.mrb[0].mxu0
      %v603 = vadd.f32 0.0, %v602
      %v604 = vpop.f32.mrb[0].mxu0
      %v605 = vpop.f32.mrb[0].mxu0
      %v606 = vadd.f32 0.0, %v605
      %v607 = vpop.f32.mrb[0].mxu0
      %608 = vmatprep.mubr.bf16.mxu0 0
      %609 = vmatmul.mubr.bf16.gmra.mrb[0].mxu0 %v441
      %v610 = vpop.f32.mrb[0].mxu0
      %v611 = vadd.f32 0.0, %v610
      %v612 = vpop.f32.mrb[0].mxu0
      %v613 = vpop.f32.mrb[0].mxu0
      %v614 = vadd.f32 0.0, %v613
      %v615 = vpop.f32.mrb[0].mxu0
      %616 = vmatprep.mubr.bf16.mxu0 0
      %617 = vmatmul.mubr.bf16.gmra.mrb[0].mxu0 %v444
      %v618 = vpop.f32.mrb[0].mxu0
      %v619 = vadd.f32 0.0, %v618
      %v620 = vpop.f32.mrb[0].mxu0
      %v621 = vpop.f32.mrb[0].mxu0
      %v622 = vadd.f32 0.0, %v621
      %v623 = vpop.f32.mrb[0].mxu0
      %624 = vmatprep.mubr.bf16.mxu0 0
      %625 = vmatmul.mubr.bf16.gmra.mrb[0].mxu0 %v447
      %v626 = vpop.f32.mrb[0].mxu0
      %v627 = vadd.f32 0.0, %v626
      %v628 = vpop.f32.mrb[0].mxu0
      %v629 = vpop.f32.mrb[0].mxu0
      %v630 = vadd.f32 0.0, %v629
      %v631 = vpop.f32.mrb[0].mxu0
      %632 = vmatprep.mubr.bf16.mxu0 0
      %633 = vmatmul.mubr.bf16.gmra.mrb[0].mxu0 %v450
      %v634 = vpop.f32.mrb[0].mxu0
      %v635 = vadd.f32 0.0, %v634
      %v636 = vpop.f32.mrb[0].mxu0
      %v637 = vpop.f32.mrb[0].mxu0
      %v638 = vadd.f32 0.0, %v637
      %v639 = vpop.f32.mrb[0].mxu0
      %640 = vmatprep.mubr.bf16.mxu0 0
      %641 = vmatmul.mubr.bf16.gmra.mrb[0].mxu0 %v453
      %v642 = vpop.f32.mrb[0].mxu0
      %v643 = vadd.f32 0.0, %v642
      %v644 = vpop.f32.mrb[0].mxu0
      %v645 = vpop.f32.mrb[0].mxu0
      %v646 = vadd.f32 0.0, %v645
      %v647 = vpop.f32.mrb[0].mxu0
      %648 = vmatprep.mubr.bf16.mxu0 0
      %649 = vmatmul.mubr.bf16.gmra.mrb[0].mxu0 %v456
      %v650 = vpop.f32.mrb[0].mxu0
      %v651 = vadd.f32 0.0, %v650
      %v652 = vpop.f32.mrb[0].mxu0
      %v653 = vpop.f32.mrb[0].mxu0
      %v654 = vadd.f32 0.0, %v653
      %v655 = vpop.f32.mrb[0].mxu0
      %656 = vmatprep.mubr.bf16.mxu0 0
      %657 = vmatmul.mubr.bf16.gmra.mrb[0].mxu0 %v459
      %v658 = vpop.f32.mrb[0].mxu0
      %v659 = vadd.f32 0.0, %v658
      %v660 = vpop.f32.mrb[0].mxu0
      %v661 = vpop.f32.mrb[0].mxu0
      %v662 = vadd.f32 0.0, %v661
      %v663 = vpop.f32.mrb[0].mxu0
      %664 = vmatprep.mubr.bf16.mxu0 0
      %665 = vmatmul.mubr.bf16.gmra.mrb[0].mxu0 %v462
      %v666 = vpop.f32.mrb[0].mxu0
      %v667 = vadd.f32 0.0, %v666
      %v668 = vpop.f32.mrb[0].mxu0
      %v669 = vpop.f32.mrb[0].mxu0
      %v670 = vadd.f32 0.0, %v669
      %v671 = vpop.f32.mrb[0].mxu0
      %672 = vmatprep.mubr.bf16.mxu0 0
      %673 = vmatmul.mubr.bf16.gmra.mrb[0].mxu0 %v465
      %v674 = vpop.f32.mrb[0].mxu0
      %v675 = vadd.f32 0.0, %v674
      %v676 = vpop.f32.mrb[0].mxu0
      %v677 = vpop.f32.mrb[0].mxu0
      %v678 = vadd.f32 0.0, %v677
      %v679 = vpop.f32.mrb[0].mxu0
      %680 = vmatprep.mubr.bf16.mxu0 0
      %681 = vmatmul.mubr.bf16.gmra.mrb[0].mxu0 %v468
      %v682 = vpop.f32.mrb[0].mxu0
      %v683 = vadd.f32 0.0, %v682
      %v684 = vpop.f32.mrb[0].mxu0
      %v685 = vpop.f32.mrb[0].mxu0
      %v686 = vadd.f32 0.0, %v685
      %v687 = vpop.f32.mrb[0].mxu0
      %688 = vmatprep.mubr.bf16.mxu0 0
      %689 = vmatmul.mubr.bf16.gmra.mrb[0].mxu0 %v471
      %v690 = vpop.f32.mrb[0].mxu0
      %v691 = vadd.f32 0.0, %v690
      %v692 = vpop.f32.mrb[0].mxu0
      %v693 = vpop.f32.mrb[0].mxu0
      %v694 = vadd.f32 0.0, %v693
      %v695 = vpop.f32.mrb[0].mxu0
      %696 = vmatprep.mubr.bf16.mxu0 0
      %697 = vmatmul.mubr.bf16.gmra.mrb[0].mxu0 %v474
      %v698 = vpop.f32.mrb[0].mxu0
      %v699 = vadd.f32 0.0, %v698
      %v700 = vpop.f32.mrb[0].mxu0
      %v701 = vpop.f32.mrb[0].mxu0
      %v702 = vadd.f32 0.0, %v701
      %v703 = vpop.f32.mrb[0].mxu0
      %704 = vmatprep.mubr.bf16.mxu0 0
      %705 = vmatmul.mubr.bf16.gmra.mrb[0].mxu0 %v477
      %v706 = vpop.f32.mrb[0].mxu0
      %v707 = vadd.f32 0.0, %v706
      %v708 = vpop.f32.mrb[0].mxu0
      %v709 = vpop.f32.mrb[0].mxu0
      %v710 = vadd.f32 0.0, %v709
      %v711 = vpop.f32.mrb[0].mxu0
      %712 = vmatprep.mubr.bf16.mxu0 0
      %713 = vmatmul.mubr.bf16.gmra.mrb[0].mxu0 %v480
      %v714 = vpop.f32.mrb[0].mxu0
      %v715 = vadd.f32 0.0, %v714
      %v716 = vpop.f32.mrb[0].mxu0
      %v717 = vpop.f32.mrb[0].mxu0
      %v718 = vadd.f32 0.0, %v717
      %v719 = vpop.f32.mrb[0].mxu0
      %720 = vmatprep.mubr.bf16.mxu0 0
      %721 = vmatmul.mubr.bf16.gmra.mrb[0].mxu0 %v483
      %v722 = vpop.f32.mrb[0].mxu0
      %v723 = vadd.f32 0.0, %v722
      %v724 = vpop.f32.mrb[0].mxu0
      %v725 = vpop.f32.mrb[0].mxu0
      %v726 = vadd.f32 0.0, %v725
      %v727 = vpop.f32.mrb[0].mxu0
      %728 = vmatprep.mubr.bf16.mxu0 0
      %729 = vmatmul.mubr.bf16.gmra.mrb[0].mxu0 %v486
      %v730 = vpop.f32.mrb[0].mxu0
      %v731 = vadd.f32 0.0, %v730
      %v732 = vpop.f32.mrb[0].mxu0
      %v733 = vpop.f32.mrb[0].mxu0
      %v734 = vadd.f32 0.0, %v733
      %v735 = vpop.f32.mrb[0].mxu0
      %736 = vmatprep.mubr.bf16.mxu0 0
      %737 = vmatmul.mubr.bf16.gmra.mrb[0].mxu0 %v489
      %v738 = vpop.f32.mrb[0].mxu0
      %v739 = vadd.f32 0.0, %v738
      %v740 = vpop.f32.mrb[0].mxu0
      %v741 = vpop.f32.mrb[0].mxu0
      %v742 = vadd.f32 0.0, %v741
      %v743 = vpop.f32.mrb[0].mxu0
      %744 = vmatprep.mubr.bf16.mxu0 0
      %745 = vmatmul.mubr.bf16.gmra.mrb[0].mxu0 %v492
      %v746 = vpop.f32.mrb[0].mxu0
      %v747 = vadd.f32 0.0, %v746
      %v748 = vpop.f32.mrb[0].mxu0
      %v749 = vpop.f32.mrb[0].mxu0
      %v750 = vadd.f32 0.0, %v749
      %v751 = vpop.f32.mrb[0].mxu0
      %752 = vmatprep.mubr.bf16.mxu0 0
      %753 = vmatmul.mubr.bf16.gmra.mrb[0].mxu0 %v495
      %v754 = vpop.f32.mrb[0].mxu0
      %v755 = vadd.f32 0.0, %v754
      %v756 = vpop.f32.mrb[0].mxu0
      %v757 = vpop.f32.mrb[0].mxu0
      %v758 = vadd.f32 0.0, %v757
      %v759 = vpop.f32.mrb[0].mxu0
      %760 = vmatprep.mubr.bf16.mxu0 0
      %761 = vmatmul.mubr.bf16.gmra.mrb[0].mxu0 %v498
      %v762 = vpop.f32.mrb[0].mxu0
      %v763 = vadd.f32 0.0, %v762
      %v764 = vpop.f32.mrb[0].mxu0
      %v765 = vpop.f32.mrb[0].mxu0
      %v766 = vadd.f32 0.0, %v765
      %v767 = vpop.f32.mrb[0].mxu0
      %768 = vmatprep.mubr.bf16.mxu0 0
      %769 = vmatmul.mubr.bf16.gmra.mrb[0].mxu0 %v501
      %v770 = vpop.f32.mrb[0].mxu0
      %v771 = vadd.f32 0.0, %v770
      %v772 = vpop.f32.mrb[0].mxu0
      %v773 = vpop.f32.mrb[0].mxu0
      %v774 = vadd.f32 0.0, %v773
      %v775 = vpop.f32.mrb[0].mxu0
      %776 = vmatprep.mubr.bf16.mxu0 0
      %777 = vmatmul.mubr.bf16.gmra.mrb[0].mxu0 %v504
      %v778 = vpop.f32.mrb[0].mxu0
      %v779 = vadd.f32 0.0, %v778
      %v780 = vpop.f32.mrb[0].mxu0
      %v781 = vpop.f32.mrb[0].mxu0
      %v782 = vadd.f32 0.0, %v781
      %v783 = vpop.f32.mrb[0].mxu0
      %784 = vmatprep.mubr.bf16.mxu0 0
      %785 = vmatmul.mubr.bf16.gmra.mrb[0].mxu0 %v507
      %v786 = vpop.f32.mrb[0].mxu0
      %v787 = vadd.f32 0.0, %v786
      %v788 = vpop.f32.mrb[0].mxu0
      %v789 = vpop.f32.mrb[0].mxu0
      %v790 = vadd.f32 0.0, %v789
      %v791 = vpop.f32.mrb[0].mxu0
      %792 = vmatprep.mubr.bf16.mxu0 0
      %793 = vmatmul.mubr.bf16.gmra.mrb[0].mxu0 %v510
      %v794 = vpop.f32.mrb[0].mxu0
      %v795 = vadd.f32 0.0, %v794
      %v796 = vpop.f32.mrb[0].mxu0
      %v797 = vpop.f32.mrb[0].mxu0
      %v798 = vadd.f32 0.0, %v797
      %v799 = vpop.f32.mrb[0].mxu0
      %800 = vdwg.mxu0
      %v801 = vmax.f32 %v547, 0.0
      %v802 = vmax.f32 %v550, 0.0
      %v803 = vmax.f32 %v555, 0.0
      %v804 = vmax.f32 %v558, 0.0
      %v805 = vmax.f32 %v563, 0.0
      %v806 = vmax.f32 %v566, 0.0
      %v807 = vmax.f32 %v571, 0.0
      %v808 = vmax.f32 %v574, 0.0
      %v809 = vmax.f32 %v579, 0.0
      %v810 = vmax.f32 %v582, 0.0
      %v811 = vmax.f32 %v587, 0.0
      %v812 = vmax.f32 %v590, 0.0
      %v813 = vmax.f32 %v595, 0.0
      %v814 = vmax.f32 %v598, 0.0
      %v815 = vmax.f32 %v603, 0.0
      %v816 = vmax.f32 %v606, 0.0
      %v817 = vmax.f32 %v611, 0.0
      %v818 = vmax.f32 %v614, 0.0
      %v819 = vmax.f32 %v619, 0.0
      %v820 = vmax.f32 %v622, 0.0
      %v821 = vmax.f32 %v627, 0.0
      %v822 = vmax.f32 %v630, 0.0
      %v823 = vmax.f32 %v635, 0.0
      %v824 = vmax.f32 %v638, 0.0
      %v825 = vmax.f32 %v643, 0.0
      %v826 = vmax.f32 %v646, 0.0
      %v827 = vmax.f32 %v651, 0.0
      %v828 = vmax.f32 %v654, 0.0
      %v829 = vmax.f32 %v659, 0.0
      %v830 = vmax.f32 %v662, 0.0
      %v831 = vmax.f32 %v667, 0.0
      %v832 = vmax.f32 %v670, 0.0
      %v833 = vmax.f32 %v675, 0.0
      %v834 = vmax.f32 %v678, 0.0
      %v835 = vmax.f32 %v683, 0.0
      %v836 = vmax.f32 %v686, 0.0
      %v837 = vmax.f32 %v691, 0.0
      %v838 = vmax.f32 %v694, 0.0
      %v839 = vmax.f32 %v699, 0.0
      %v840 = vmax.f32 %v702, 0.0
      %v841 = vmax.f32 %v707, 0.0
      %v842 = vmax.f32 %v710, 0.0
      %v843 = vmax.f32 %v715, 0.0
      %v844 = vmax.f32 %v718, 0.0
      %v845 = vmax.f32 %v723, 0.0
      %v846 = vmax.f32 %v726, 0.0
      %v847 = vmax.f32 %v731, 0.0
      %v848 = vmax.f32 %v734, 0.0
      %v849 = vmax.f32 %v739, 0.0
      %v850 = vmax.f32 %v742, 0.0
      %v851 = vmax.f32 %v747, 0.0
      %v852 = vmax.f32 %v750, 0.0
      %v853 = vmax.f32 %v755, 0.0
      %v854 = vmax.f32 %v758, 0.0
      %v855 = vmax.f32 %v763, 0.0
      %v856 = vmax.f32 %v766, 0.0
      %v857 = vmax.f32 %v771, 0.0
      %v858 = vmax.f32 %v774, 0.0
      %v859 = vmax.f32 %v779, 0.0
      %v860 = vmax.f32 %v782, 0.0
      %v861 = vmax.f32 %v787, 0.0
      %v862 = vmax.f32 %v790, 0.0
      %v863 = vmax.f32 %v795, 0.0
      %v864 = vmax.f32 %v798, 0.0
      %v865 = vpack.c.bf16 %v802, %v801
      %v866 = vpack.c.bf16 %v804, %v803
      %v867 = vpack.c.bf16 %v806, %v805
      %v868 = vpack.c.bf16 %v808, %v807
      %v869 = vpack.c.bf16 %v810, %v809
      %v870 = vpack.c.bf16 %v812, %v811
      %v871 = vpack.c.bf16 %v814, %v813
      %v872 = vpack.c.bf16 %v816, %v815
      %v873 = vpack.c.bf16 %v818, %v817
      %v874 = vpack.c.bf16 %v820, %v819
      %v875 = vpack.c.bf16 %v822, %v821
      %v876 = vpack.c.bf16 %v824, %v823
      %v877 = vpack.c.bf16 %v826, %v825
      %v878 = vpack.c.bf16 %v828, %v827
      %v879 = vpack.c.bf16 %v830, %v829
      %v880 = vpack.c.bf16 %v832, %v831
      %v881 = vpack.c.bf16 %v834, %v833
      %v882 = vpack.c.bf16 %v836, %v835
      %v883 = vpack.c.bf16 %v838, %v837
      %v884 = vpack.c.bf16 %v840, %v839
      %v885 = vpack.c.bf16 %v842, %v841
      %v886 = vpack.c.bf16 %v844, %v843
      %v887 = vpack.c.bf16 %v846, %v845
      %v888 = vpack.c.bf16 %v848, %v847
      %v889 = vpack.c.bf16 %v850, %v849
      %v890 = vpack.c.bf16 %v852, %v851
      %v891 = vpack.c.bf16 %v854, %v853
      %v892 = vpack.c.bf16 %v856, %v855
      %v893 = vpack.c.bf16 %v858, %v857
      %v894 = vpack.c.bf16 %v860, %v859
      %v895 = vpack.c.bf16 %v862, %v861
      %v896 = vpack.c.bf16 %v864, %v863
      %v897 = vld [vmem:[%s2] sm:$0xf]
      %v898 = vld [vmem:[%s2 + $0x4] sm:$0xf]
      %v899 = vld [vmem:[%s2 + $0x8] sm:$0xf]
      %v900 = vld [vmem:[%s2 + $0xc] sm:$0xf]
      %v901 = vld [vmem:[%s2 + $0x10] sm:$0xf]
      %v902 = vld [vmem:[%s2 + $0x14] sm:$0xf]
      %v903 = vld [vmem:[%s2 + $0x18] sm:$0xf]
      %v904 = vld [vmem:[%s2 + $0x1c] sm:$0xf]
      %v905 = vld [vmem:[%s2 + $0x20] sm:$0xf]
      %v906 = vld [vmem:[%s2 + $0x24] sm:$0xf]
      %v907 = vld [vmem:[%s2 + $0x28] sm:$0xf]
      %v908 = vld [vmem:[%s2 + $0x2c] sm:$0xf]
      %v909 = vld [vmem:[%s2 + $0x30] sm:$0xf]
      %v910 = vld [vmem:[%s2 + $0x34] sm:$0xf]
      %v911 = vld [vmem:[%s2 + $0x38] sm:$0xf]
      %v912 = vld [vmem:[%s2 + $0x3c] sm:$0xf]
      %v929 = vunpack.c.l.b16 %v897
      %v930 = vunpack.c.l.b16 %v898
      %v931 = vunpack.c.l.b16 %v899
      %v932 = vunpack.c.l.b16 %v900
      %v933 = vunpack.c.l.b16 %v901
      %v934 = vunpack.c.l.b16 %v902
      %v935 = vunpack.c.l.b16 %v903
      %v936 = vunpack.c.l.b16 %v904
      %v937 = vunpack.c.l.b16 %v905
      %v938 = vunpack.c.l.b16 %v906
      %v939 = vunpack.c.l.b16 %v907
      %v940 = vunpack.c.l.b16 %v908
      %v941 = vunpack.c.l.b16 %v909
      %v942 = vunpack.c.l.b16 %v910
      %v943 = vunpack.c.l.b16 %v911
      %v944 = vunpack.c.l.b16 %v912
      %v945 = vpack.c.b16 %v930, %v929
      %v946 = vpack.c.b16 %v932, %v931
      %v947 = vpack.c.b16 %v934, %v933
      %v948 = vpack.c.b16 %v936, %v935
      %v949 = vpack.c.b16 %v938, %v937
      %v950 = vpack.c.b16 %v940, %v939
      %v951 = vpack.c.b16 %v942, %v941
      %v952 = vpack.c.b16 %v944, %v943
      %961 = vmatprep.subr.bf16.mxu0 0
      %962 = vmatpush1.bf16.msra.mxu0 %v945
      %963 = vmatprep.subr.bf16.mxu0 0
      %964 = vmatpush1.bf16.msra.mxu0 %v946
      %965 = vmatprep.subr.bf16.mxu0 0
      %966 = vmatpush1.bf16.msra.mxu0 %v947
      %967 = vmatprep.subr.bf16.mxu0 0
      %968 = vmatpush1.bf16.msra.mxu0 %v948
      %969 = vmatprep.subr.bf16.mxu0 0
      %970 = vmatpush1.bf16.msra.mxu0 %v949
      %971 = vmatprep.subr.bf16.mxu0 0
      %972 = vmatpush1.bf16.msra.mxu0 %v950
      %973 = vmatprep.subr.bf16.mxu0 0
      %974 = vmatpush1.bf16.msra.mxu0 %v951
      %975 = vmatprep.subr.bf16.mxu0 0
      %976 = vmatpush1.bf16.msra.mxu0 %v952
      %977 = vmatprep.subr.bf16.mxu0 0
      %978 = vmatpush1.bf16.msra.mxu0 0
      %979 = vmatprep.subr.bf16.mxu0 0
      %980 = vmatpush1.bf16.msra.mxu0 0
      %981 = vmatprep.subr.bf16.mxu0 0
      %982 = vmatpush1.bf16.msra.mxu0 0
      %983 = vmatprep.subr.bf16.mxu0 0
      %984 = vmatpush1.bf16.msra.mxu0 0
      %985 = vmatprep.subr.bf16.mxu0 0
      %986 = vmatpush1.bf16.msra.mxu0 0
      %987 = vmatprep.subr.bf16.mxu0 0
      %988 = vmatpush1.bf16.msra.mxu0 0
      %989 = vmatprep.subr.bf16.mxu0 0
      %990 = vmatpush1.bf16.msra.mxu0 0
      %991 = vmatprep.subr.bf16.mxu0 0
      %992 = vmatpush1.bf16.msra.mxu0 0
      %993 = vmatprep.mubr.bf16.mxu0 0
      %994 = vmatmul.mubr.bf16.gmra.mrb[0].mxu0 %v865
      %v995 = vpop.f32.mrb[0].mxu0
      %v996 = vadd.f32 0.0, %v995
      %v997 = vpop.f32.mrb[0].mxu0
      %v998 = vpop.f32.mrb[0].mxu0
      %v999 = vadd.f32 0.0, %v998
      %v1000 = vpop.f32.mrb[0].mxu0
      %1001 = vmatprep.mubr.bf16.mxu0 0
      %1002 = vmatmul.mubr.bf16.gmra.mrb[0].mxu0 %v866
      %v1003 = vpop.f32.mrb[0].mxu0
      %v1004 = vadd.f32 0.0, %v1003
      %v1005 = vpop.f32.mrb[0].mxu0
      %v1006 = vpop.f32.mrb[0].mxu0
      %v1007 = vadd.f32 0.0, %v1006
      %v1008 = vpop.f32.mrb[0].mxu0
      %1009 = vmatprep.mubr.bf16.mxu0 0
      %1010 = vmatmul.mubr.bf16.gmra.mrb[0].mxu0 %v867
      %v1011 = vpop.f32.mrb[0].mxu0
      %v1012 = vadd.f32 0.0, %v1011
      %v1013 = vpop.f32.mrb[0].mxu0
      %v1014 = vpop.f32.mrb[0].mxu0
      %v1015 = vadd.f32 0.0, %v1014
      %v1016 = vpop.f32.mrb[0].mxu0
      %1017 = vmatprep.mubr.bf16.mxu0 0
      %1018 = vmatmul.mubr.bf16.gmra.mrb[0].mxu0 %v868
      %v1019 = vpop.f32.mrb[0].mxu0
      %v1020 = vadd.f32 0.0, %v1019
      %v1021 = vpop.f32.mrb[0].mxu0
      %v1022 = vpop.f32.mrb[0].mxu0
      %v1023 = vadd.f32 0.0, %v1022
      %v1024 = vpop.f32.mrb[0].mxu0
      %1025 = vmatprep.mubr.bf16.mxu0 0
      %1026 = vmatmul.mubr.bf16.gmra.mrb[0].mxu0 %v869
      %v1027 = vpop.f32.mrb[0].mxu0
      %v1028 = vadd.f32 0.0, %v1027
      %v1029 = vpop.f32.mrb[0].mxu0
      %v1030 = vpop.f32.mrb[0].mxu0
      %v1031 = vadd.f32 0.0, %v1030
      %v1032 = vpop.f32.mrb[0].mxu0
      %1033 = vmatprep.mubr.bf16.mxu0 0
      %1034 = vmatmul.mubr.bf16.gmra.mrb[0].mxu0 %v870
      %v1035 = vpop.f32.mrb[0].mxu0
      %v1036 = vadd.f32 0.0, %v1035
      %v1037 = vpop.f32.mrb[0].mxu0
      %v1038 = vpop.f32.mrb[0].mxu0
      %v1039 = vadd.f32 0.0, %v1038
      %v1040 = vpop.f32.mrb[0].mxu0
      %1041 = vmatprep.mubr.bf16.mxu0 0
      %1042 = vmatmul.mubr.bf16.gmra.mrb[0].mxu0 %v871
      %v1043 = vpop.f32.mrb[0].mxu0
      %v1044 = vadd.f32 0.0, %v1043
      %v1045 = vpop.f32.mrb[0].mxu0
      %v1046 = vpop.f32.mrb[0].mxu0
      %v1047 = vadd.f32 0.0, %v1046
      %v1048 = vpop.f32.mrb[0].mxu0
      %1049 = vmatprep.mubr.bf16.mxu0 0
      %1050 = vmatmul.mubr.bf16.gmra.mrb[0].mxu0 %v872
      %v1051 = vpop.f32.mrb[0].mxu0
      %v1052 = vadd.f32 0.0, %v1051
      %v1053 = vpop.f32.mrb[0].mxu0
      %v1054 = vpop.f32.mrb[0].mxu0
      %v1055 = vadd.f32 0.0, %v1054
      %v1056 = vpop.f32.mrb[0].mxu0
      %1057 = vmatprep.mubr.bf16.mxu0 0
      %1058 = vmatmul.mubr.bf16.gmra.mrb[0].mxu0 %v873
      %v1059 = vpop.f32.mrb[0].mxu0
      %v1060 = vadd.f32 0.0, %v1059
      %v1061 = vpop.f32.mrb[0].mxu0
      %v1062 = vpop.f32.mrb[0].mxu0
      %v1063 = vadd.f32 0.0, %v1062
      %v1064 = vpop.f32.mrb[0].mxu0
      %1065 = vmatprep.mubr.bf16.mxu0 0
      %1066 = vmatmul.mubr.bf16.gmra.mrb[0].mxu0 %v874
      %v1067 = vpop.f32.mrb[0].mxu0
      %v1068 = vadd.f32 0.0, %v1067
      %v1069 = vpop.f32.mrb[0].mxu0
      %v1070 = vpop.f32.mrb[0].mxu0
      %v1071 = vadd.f32 0.0, %v1070
      %v1072 = vpop.f32.mrb[0].mxu0
      %1073 = vmatprep.mubr.bf16.mxu0 0
      %1074 = vmatmul.mubr.bf16.gmra.mrb[0].mxu0 %v875
      %v1075 = vpop.f32.mrb[0].mxu0
      %v1076 = vadd.f32 0.0, %v1075
      %v1077 = vpop.f32.mrb[0].mxu0
      %v1078 = vpop.f32.mrb[0].mxu0
      %v1079 = vadd.f32 0.0, %v1078
      %v1080 = vpop.f32.mrb[0].mxu0
      %1081 = vmatprep.mubr.bf16.mxu0 0
      %1082 = vmatmul.mubr.bf16.gmra.mrb[0].mxu0 %v876
      %v1083 = vpop.f32.mrb[0].mxu0
      %v1084 = vadd.f32 0.0, %v1083
      %v1085 = vpop.f32.mrb[0].mxu0
      %v1086 = vpop.f32.mrb[0].mxu0
      %v1087 = vadd.f32 0.0, %v1086
      %v1088 = vpop.f32.mrb[0].mxu0
      %1089 = vmatprep.mubr.bf16.mxu0 0
      %1090 = vmatmul.mubr.bf16.gmra.mrb[0].mxu0 %v877
      %v1091 = vpop.f32.mrb[0].mxu0
      %v1092 = vadd.f32 0.0, %v1091
      %v1093 = vpop.f32.mrb[0].mxu0
      %v1094 = vpop.f32.mrb[0].mxu0
      %v1095 = vadd.f32 0.0, %v1094
      %v1096 = vpop.f32.mrb[0].mxu0
      %1097 = vmatprep.mubr.bf16.mxu0 0
      %1098 = vmatmul.mubr.bf16.gmra.mrb[0].mxu0 %v878
      %v1099 = vpop.f32.mrb[0].mxu0
      %v1100 = vadd.f32 0.0, %v1099
      %v1101 = vpop.f32.mrb[0].mxu0
      %v1102 = vpop.f32.mrb[0].mxu0
      %v1103 = vadd.f32 0.0, %v1102
      %v1104 = vpop.f32.mrb[0].mxu0
      %1105 = vmatprep.mubr.bf16.mxu0 0
      %1106 = vmatmul.mubr.bf16.gmra.mrb[0].mxu0 %v879
      %v1107 = vpop.f32.mrb[0].mxu0
      %v1108 = vadd.f32 0.0, %v1107
      %v1109 = vpop.f32.mrb[0].mxu0
      %v1110 = vpop.f32.mrb[0].mxu0
      %v1111 = vadd.f32 0.0, %v1110
      %v1112 = vpop.f32.mrb[0].mxu0
      %1113 = vmatprep.mubr.bf16.mxu0 0
      %1114 = vmatmul.mubr.bf16.gmra.mrb[0].mxu0 %v880
      %v1115 = vpop.f32.mrb[0].mxu0
      %v1116 = vadd.f32 0.0, %v1115
      %v1117 = vpop.f32.mrb[0].mxu0
      %v1118 = vpop.f32.mrb[0].mxu0
      %v1119 = vadd.f32 0.0, %v1118
      %v1120 = vpop.f32.mrb[0].mxu0
      %1121 = vmatprep.mubr.bf16.mxu0 0
      %1122 = vmatmul.mubr.bf16.gmra.mrb[0].mxu0 %v881
      %v1123 = vpop.f32.mrb[0].mxu0
      %v1124 = vadd.f32 0.0, %v1123
      %v1125 = vpop.f32.mrb[0].mxu0
      %v1126 = vpop.f32.mrb[0].mxu0
      %v1127 = vadd.f32 0.0, %v1126
      %v1128 = vpop.f32.mrb[0].mxu0
      %1129 = vmatprep.mubr.bf16.mxu0 0
      %1130 = vmatmul.mubr.bf16.gmra.mrb[0].mxu0 %v882
      %v1131 = vpop.f32.mrb[0].mxu0
      %v1132 = vadd.f32 0.0, %v1131
      %v1133 = vpop.f32.mrb[0].mxu0
      %v1134 = vpop.f32.mrb[0].mxu0
      %v1135 = vadd.f32 0.0, %v1134
      %v1136 = vpop.f32.mrb[0].mxu0
      %1137 = vmatprep.mubr.bf16.mxu0 0
      %1138 = vmatmul.mubr.bf16.gmra.mrb[0].mxu0 %v883
      %v1139 = vpop.f32.mrb[0].mxu0
      %v1140 = vadd.f32 0.0, %v1139
      %v1141 = vpop.f32.mrb[0].mxu0
      %v1142 = vpop.f32.mrb[0].mxu0
      %v1143 = vadd.f32 0.0, %v1142
      %v1144 = vpop.f32.mrb[0].mxu0
      %1145 = vmatprep.mubr.bf16.mxu0 0
      %1146 = vmatmul.mubr.bf16.gmra.mrb[0].mxu0 %v884
      %v1147 = vpop.f32.mrb[0].mxu0
      %v1148 = vadd.f32 0.0, %v1147
      %v1149 = vpop.f32.mrb[0].mxu0
      %v1150 = vpop.f32.mrb[0].mxu0
      %v1151 = vadd.f32 0.0, %v1150
      %v1152 = vpop.f32.mrb[0].mxu0
      %1153 = vmatprep.mubr.bf16.mxu0 0
      %1154 = vmatmul.mubr.bf16.gmra.mrb[0].mxu0 %v885
      %v1155 = vpop.f32.mrb[0].mxu0
      %v1156 = vadd.f32 0.0, %v1155
      %v1157 = vpop.f32.mrb[0].mxu0
      %v1158 = vpop.f32.mrb[0].mxu0
      %v1159 = vadd.f32 0.0, %v1158
      %v1160 = vpop.f32.mrb[0].mxu0
      %1161 = vmatprep.mubr.bf16.mxu0 0
      %1162 = vmatmul.mubr.bf16.gmra.mrb[0].mxu0 %v886
      %v1163 = vpop.f32.mrb[0].mxu0
      %v1164 = vadd.f32 0.0, %v1163
      %v1165 = vpop.f32.mrb[0].mxu0
      %v1166 = vpop.f32.mrb[0].mxu0
      %v1167 = vadd.f32 0.0, %v1166
      %v1168 = vpop.f32.mrb[0].mxu0
      %1169 = vmatprep.mubr.bf16.mxu0 0
      %1170 = vmatmul.mubr.bf16.gmra.mrb[0].mxu0 %v887
      %v1171 = vpop.f32.mrb[0].mxu0
      %v1172 = vadd.f32 0.0, %v1171
      %v1173 = vpop.f32.mrb[0].mxu0
      %v1174 = vpop.f32.mrb[0].mxu0
      %v1175 = vadd.f32 0.0, %v1174
      %v1176 = vpop.f32.mrb[0].mxu0
      %1177 = vmatprep.mubr.bf16.mxu0 0
      %1178 = vmatmul.mubr.bf16.gmra.mrb[0].mxu0 %v888
      %v1179 = vpop.f32.mrb[0].mxu0
      %v1180 = vadd.f32 0.0, %v1179
      %v1181 = vpop.f32.mrb[0].mxu0
      %v1182 = vpop.f32.mrb[0].mxu0
      %v1183 = vadd.f32 0.0, %v1182
      %v1184 = vpop.f32.mrb[0].mxu0
      %1185 = vmatprep.mubr.bf16.mxu0 0
      %1186 = vmatmul.mubr.bf16.gmra.mrb[0].mxu0 %v889
      %v1187 = vpop.f32.mrb[0].mxu0
      %v1188 = vadd.f32 0.0, %v1187
      %v1189 = vpop.f32.mrb[0].mxu0
      %v1190 = vpop.f32.mrb[0].mxu0
      %v1191 = vadd.f32 0.0, %v1190
      %v1192 = vpop.f32.mrb[0].mxu0
      %1193 = vmatprep.mubr.bf16.mxu0 0
      %1194 = vmatmul.mubr.bf16.gmra.mrb[0].mxu0 %v890
      %v1195 = vpop.f32.mrb[0].mxu0
      %v1196 = vadd.f32 0.0, %v1195
      %v1197 = vpop.f32.mrb[0].mxu0
      %v1198 = vpop.f32.mrb[0].mxu0
      %v1199 = vadd.f32 0.0, %v1198
      %v1200 = vpop.f32.mrb[0].mxu0
      %1201 = vmatprep.mubr.bf16.mxu0 0
      %1202 = vmatmul.mubr.bf16.gmra.mrb[0].mxu0 %v891
      %v1203 = vpop.f32.mrb[0].mxu0
      %v1204 = vadd.f32 0.0, %v1203
      %v1205 = vpop.f32.mrb[0].mxu0
      %v1206 = vpop.f32.mrb[0].mxu0
      %v1207 = vadd.f32 0.0, %v1206
      %v1208 = vpop.f32.mrb[0].mxu0
      %1209 = vmatprep.mubr.bf16.mxu0 0
      %1210 = vmatmul.mubr.bf16.gmra.mrb[0].mxu0 %v892
      %v1211 = vpop.f32.mrb[0].mxu0
      %v1212 = vadd.f32 0.0, %v1211
      %v1213 = vpop.f32.mrb[0].mxu0
      %v1214 = vpop.f32.mrb[0].mxu0
      %v1215 = vadd.f32 0.0, %v1214
      %v1216 = vpop.f32.mrb[0].mxu0
      %1217 = vmatprep.mubr.bf16.mxu0 0
      %1218 = vmatmul.mubr.bf16.gmra.mrb[0].mxu0 %v893
      %v1219 = vpop.f32.mrb[0].mxu0
      %v1220 = vadd.f32 0.0, %v1219
      %v1221 = vpop.f32.mrb[0].mxu0
      %v1222 = vpop.f32.mrb[0].mxu0
      %v1223 = vadd.f32 0.0, %v1222
      %v1224 = vpop.f32.mrb[0].mxu0
      %1225 = vmatprep.mubr.bf16.mxu0 0
      %1226 = vmatmul.mubr.bf16.gmra.mrb[0].mxu0 %v894
      %v1227 = vpop.f32.mrb[0].mxu0
      %v1228 = vadd.f32 0.0, %v1227
      %v1229 = vpop.f32.mrb[0].mxu0
      %v1230 = vpop.f32.mrb[0].mxu0
      %v1231 = vadd.f32 0.0, %v1230
      %v1232 = vpop.f32.mrb[0].mxu0
      %1233 = vmatprep.mubr.bf16.mxu0 0
      %1234 = vmatmul.mubr.bf16.gmra.mrb[0].mxu0 %v895
      %v1235 = vpop.f32.mrb[0].mxu0
      %v1236 = vadd.f32 0.0, %v1235
      %v1237 = vpop.f32.mrb[0].mxu0
      %v1238 = vpop.f32.mrb[0].mxu0
      %v1239 = vadd.f32 0.0, %v1238
      %v1240 = vpop.f32.mrb[0].mxu0
      %1241 = vmatprep.mubr.bf16.mxu0 0
      %1242 = vmatmul.mubr.bf16.gmra.mrb[0].mxu0 %v896
      %v1243 = vpop.f32.mrb[0].mxu0
      %v1244 = vadd.f32 0.0, %v1243
      %v1245 = vpop.f32.mrb[0].mxu0
      %v1246 = vpop.f32.mrb[0].mxu0
      %v1247 = vadd.f32 0.0, %v1246
      %v1248 = vpop.f32.mrb[0].mxu0
      %1249 = vdwg.mxu0
      %v1250 = vsub.f32 0.0, %v996
      %v1251 = vsub.f32 0.0, %v999
      %v1252 = vsub.f32 0.0, %v1004
      %v1253 = vsub.f32 0.0, %v1007
      %v1254 = vsub.f32 0.0, %v1012
      %v1255 = vsub.f32 0.0, %v1015
      %v1256 = vsub.f32 0.0, %v1020
      %v1257 = vsub.f32 0.0, %v1023
      %v1258 = vsub.f32 0.0, %v1028
      %v1259 = vsub.f32 0.0, %v1031
      %v1260 = vsub.f32 0.0, %v1036
      %v1261 = vsub.f32 0.0, %v1039
      %v1262 = vsub.f32 0.0, %v1044
      %v1263 = vsub.f32 0.0, %v1047
      %v1264 = vsub.f32 0.0, %v1052
      %v1265 = vsub.f32 0.0, %v1055
      %v1266 = vsub.f32 0.0, %v1060
      %v1267 = vsub.f32 0.0, %v1063
      %v1268 = vsub.f32 0.0, %v1068
      %v1269 = vsub.f32 0.0, %v1071
      %v1270 = vsub.f32 0.0, %v1076
      %v1271 = vsub.f32 0.0, %v1079
      %v1272 = vsub.f32 0.0, %v1084
      %v1273 = vsub.f32 0.0, %v1087
      %v1274 = vsub.f32 0.0, %v1092
      %v1275 = vsub.f32 0.0, %v1095
      %v1276 = vsub.f32 0.0, %v1100
      %v1277 = vsub.f32 0.0, %v1103
      %v1278 = vsub.f32 0.0, %v1108
      %v1279 = vsub.f32 0.0, %v1111
      %v1280 = vsub.f32 0.0, %v1116
      %v1281 = vsub.f32 0.0, %v1119
      %v1282 = vsub.f32 0.0, %v1124
      %v1283 = vsub.f32 0.0, %v1127
      %v1284 = vsub.f32 0.0, %v1132
      %v1285 = vsub.f32 0.0, %v1135
      %v1286 = vsub.f32 0.0, %v1140
      %v1287 = vsub.f32 0.0, %v1143
      %v1288 = vsub.f32 0.0, %v1148
      %v1289 = vsub.f32 0.0, %v1151
      %v1290 = vsub.f32 0.0, %v1156
      %v1291 = vsub.f32 0.0, %v1159
      %v1292 = vsub.f32 0.0, %v1164
      %v1293 = vsub.f32 0.0, %v1167
      %v1294 = vsub.f32 0.0, %v1172
      %v1295 = vsub.f32 0.0, %v1175
      %v1296 = vsub.f32 0.0, %v1180
      %v1297 = vsub.f32 0.0, %v1183
      %v1298 = vsub.f32 0.0, %v1188
      %v1299 = vsub.f32 0.0, %v1191
      %v1300 = vsub.f32 0.0, %v1196
      %v1301 = vsub.f32 0.0, %v1199
      %v1302 = vsub.f32 0.0, %v1204
      %v1303 = vsub.f32 0.0, %v1207
      %v1304 = vsub.f32 0.0, %v1212
      %v1305 = vsub.f32 0.0, %v1215
      %v1306 = vsub.f32 0.0, %v1220
      %v1307 = vsub.f32 0.0, %v1223
      %v1308 = vsub.f32 0.0, %v1228
      %v1309 = vsub.f32 0.0, %v1231
      %v1310 = vsub.f32 0.0, %v1236
      %v1311 = vsub.f32 0.0, %v1239
      %v1312 = vsub.f32 0.0, %v1244
      %v1313 = vsub.f32 0.0, %v1247
      %v1314 = vmul.f32 %v1250, 1.442695
      %v1315 = vpow.pop %v1314
      %v1316 = vmul.f32 %v1251, 1.442695
      %v1317 = vpow.pop %v1316
      %v1318 = vmul.f32 %v1252, 1.442695
      %v1319 = vpow.pop %v1318
      %v1320 = vmul.f32 %v1253, 1.442695
      %v1321 = vpow.pop %v1320
      %v1322 = vmul.f32 %v1254, 1.442695
      %v1323 = vpow.pop %v1322
      %v1324 = vmul.f32 %v1255, 1.442695
      %v1325 = vpow.pop %v1324
      %v1326 = vmul.f32 %v1256, 1.442695
      %v1327 = vpow.pop %v1326
      %v1328 = vmul.f32 %v1257, 1.442695
      %v1329 = vpow.pop %v1328
      %v1330 = vmul.f32 %v1258, 1.442695
      %v1331 = vpow.pop %v1330
      %v1332 = vmul.f32 %v1259, 1.442695
      %v1333 = vpow.pop %v1332
      %v1334 = vmul.f32 %v1260, 1.442695
      %v1335 = vpow.pop %v1334
      %v1336 = vmul.f32 %v1261, 1.442695
      %v1337 = vpow.pop %v1336
      %v1338 = vmul.f32 %v1262, 1.442695
      %v1339 = vpow.pop %v1338
      %v1340 = vmul.f32 %v1263, 1.442695
      %v1341 = vpow.pop %v1340
      %v1342 = vmul.f32 %v1264, 1.442695
      %v1343 = vpow.pop %v1342
      %v1344 = vmul.f32 %v1265, 1.442695
      %v1345 = vpow.pop %v1344
      %v1346 = vmul.f32 %v1266, 1.442695
      %v1347 = vpow.pop %v1346
      %v1348 = vmul.f32 %v1267, 1.442695
      %v1349 = vpow.pop %v1348
      %v1350 = vmul.f32 %v1268, 1.442695
      %v1351 = vpow.pop %v1350
      %v1352 = vmul.f32 %v1269, 1.442695
      %v1353 = vpow.pop %v1352
      %v1354 = vmul.f32 %v1270, 1.442695
      %v1355 = vpow.pop %v1354
      %v1356 = vmul.f32 %v1271, 1.442695
      %v1357 = vpow.pop %v1356
      %v1358 = vmul.f32 %v1272, 1.442695
      %v1359 = vpow.pop %v1358
      %v1360 = vmul.f32 %v1273, 1.442695
      %v1361 = vpow.pop %v1360
      %v1362 = vmul.f32 %v1274, 1.442695
      %v1363 = vpow.pop %v1362
      %v1364 = vmul.f32 %v1275, 1.442695
      %v1365 = vpow.pop %v1364
      %v1366 = vmul.f32 %v1276, 1.442695
      %v1367 = vpow.pop %v1366
      %v1368 = vmul.f32 %v1277, 1.442695
      %v1369 = vpow.pop %v1368
      %v1370 = vmul.f32 %v1278, 1.442695
      %v1371 = vpow.pop %v1370
      %v1372 = vmul.f32 %v1279, 1.442695
      %v1373 = vpow.pop %v1372
      %v1374 = vmul.f32 %v1280, 1.442695
      %v1375 = vpow.pop %v1374
      %v1376 = vmul.f32 %v1281, 1.442695
      %v1377 = vpow.pop %v1376
      %v1378 = vmul.f32 %v1282, 1.442695
      %v1379 = vpow.pop %v1378
      %v1380 = vmul.f32 %v1283, 1.442695
      %v1381 = vpow.pop %v1380
      %v1382 = vmul.f32 %v1284, 1.442695
      %v1383 = vpow.pop %v1382
      %v1384 = vmul.f32 %v1285, 1.442695
      %v1385 = vpow.pop %v1384
      %v1386 = vmul.f32 %v1286, 1.442695
      %v1387 = vpow.pop %v1386
      %v1388 = vmul.f32 %v1287, 1.442695
      %v1389 = vpow.pop %v1388
      %v1390 = vmul.f32 %v1288, 1.442695
      %v1391 = vpow.pop %v1390
      %v1392 = vmul.f32 %v1289, 1.442695
      %v1393 = vpow.pop %v1392
      %v1394 = vmul.f32 %v1290, 1.442695
      %v1395 = vpow.pop %v1394
      %v1396 = vmul.f32 %v1291, 1.442695
      %v1397 = vpow.pop %v1396
      %v1398 = vmul.f32 %v1292, 1.442695
      %v1399 = vpow.pop %v1398
      %v1400 = vmul.f32 %v1293, 1.442695
      %v1401 = vpow.pop %v1400
      %v1402 = vmul.f32 %v1294, 1.442695
      %v1403 = vpow.pop %v1402
      %v1404 = vmul.f32 %v1295, 1.442695
      %v1405 = vpow.pop %v1404
      %v1406 = vmul.f32 %v1296, 1.442695
      %v1407 = vpow.pop %v1406
      %v1408 = vmul.f32 %v1297, 1.442695
      %v1409 = vpow.pop %v1408
      %v1410 = vmul.f32 %v1298, 1.442695
      %v1411 = vpow.pop %v1410
      %v1412 = vmul.f32 %v1299, 1.442695
      %v1413 = vpow.pop %v1412
      %v1414 = vmul.f32 %v1300, 1.442695
      %v1415 = vpow.pop %v1414
      %v1416 = vmul.f32 %v1301, 1.442695
      %v1417 = vpow.pop %v1416
      %v1418 = vmul.f32 %v1302, 1.442695
      %v1419 = vpow.pop %v1418
      %v1420 = vmul.f32 %v1303, 1.442695
      %v1421 = vpow.pop %v1420
      %v1422 = vmul.f32 %v1304, 1.442695
      %v1423 = vpow.pop %v1422
      %v1424 = vmul.f32 %v1305, 1.442695
      %v1425 = vpow.pop %v1424
      %v1426 = vmul.f32 %v1306, 1.442695
      %v1427 = vpow.pop %v1426
      %v1428 = vmul.f32 %v1307, 1.442695
      %v1429 = vpow.pop %v1428
      %v1430 = vmul.f32 %v1308, 1.442695
      %v1431 = vpow.pop %v1430
      %v1432 = vmul.f32 %v1309, 1.442695
      %v1433 = vpow.pop %v1432
      %v1434 = vmul.f32 %v1310, 1.442695
      %v1435 = vpow.pop %v1434
      %v1436 = vmul.f32 %v1311, 1.442695
      %v1437 = vpow.pop %v1436
      %v1438 = vmul.f32 %v1312, 1.442695
      %v1439 = vpow.pop %v1438
      %v1440 = vmul.f32 %v1313, 1.442695
      %v1441 = vpow.pop %v1440
      %v1442 = vadd.f32 %v1315, 1.0
      %v1443 = vadd.f32 %v1317, 1.0
      %v1444 = vadd.f32 %v1319, 1.0
      %v1445 = vadd.f32 %v1321, 1.0
      %v1446 = vadd.f32 %v1323, 1.0
      %v1447 = vadd.f32 %v1325, 1.0
      %v1448 = vadd.f32 %v1327, 1.0
      %v1449 = vadd.f32 %v1329, 1.0
      %v1450 = vadd.f32 %v1331, 1.0
      %v1451 = vadd.f32 %v1333, 1.0
      %v1452 = vadd.f32 %v1335, 1.0
      %v1453 = vadd.f32 %v1337, 1.0
      %v1454 = vadd.f32 %v1339, 1.0
      %v1455 = vadd.f32 %v1341, 1.0
      %v1456 = vadd.f32 %v1343, 1.0
      %v1457 = vadd.f32 %v1345, 1.0
      %v1458 = vadd.f32 %v1347, 1.0
      %v1459 = vadd.f32 %v1349, 1.0
      %v1460 = vadd.f32 %v1351, 1.0
      %v1461 = vadd.f32 %v1353, 1.0
      %v1462 = vadd.f32 %v1355, 1.0
      %v1463 = vadd.f32 %v1357, 1.0
      %v1464 = vadd.f32 %v1359, 1.0
      %v1465 = vadd.f32 %v1361, 1.0
      %v1466 = vadd.f32 %v1363, 1.0
      %v1467 = vadd.f32 %v1365, 1.0
      %v1468 = vadd.f32 %v1367, 1.0
      %v1469 = vadd.f32 %v1369, 1.0
      %v1470 = vadd.f32 %v1371, 1.0
      %v1471 = vadd.f32 %v1373, 1.0
      %v1472 = vadd.f32 %v1375, 1.0
      %v1473 = vadd.f32 %v1377, 1.0
      %v1474 = vadd.f32 %v1379, 1.0
      %v1475 = vadd.f32 %v1381, 1.0
      %v1476 = vadd.f32 %v1383, 1.0
      %v1477 = vadd.f32 %v1385, 1.0
      %v1478 = vadd.f32 %v1387, 1.0
      %v1479 = vadd.f32 %v1389, 1.0
      %v1480 = vadd.f32 %v1391, 1.0
      %v1481 = vadd.f32 %v1393, 1.0
      %v1482 = vadd.f32 %v1395, 1.0
      %v1483 = vadd.f32 %v1397, 1.0
      %v1484 = vadd.f32 %v1399, 1.0
      %v1485 = vadd.f32 %v1401, 1.0
      %v1486 = vadd.f32 %v1403, 1.0
      %v1487 = vadd.f32 %v1405, 1.0
      %v1488 = vadd.f32 %v1407, 1.0
      %v1489 = vadd.f32 %v1409, 1.0
      %v1490 = vadd.f32 %v1411, 1.0
      %v1491 = vadd.f32 %v1413, 1.0
      %v1492 = vadd.f32 %v1415, 1.0
      %v1493 = vadd.f32 %v1417, 1.0
      %v1494 = vadd.f32 %v1419, 1.0
      %v1495 = vadd.f32 %v1421, 1.0
      %v1496 = vadd.f32 %v1423, 1.0
      %v1497 = vadd.f32 %v1425, 1.0
      %v1498 = vadd.f32 %v1427, 1.0
      %v1499 = vadd.f32 %v1429, 1.0
      %v1500 = vadd.f32 %v1431, 1.0
      %v1501 = vadd.f32 %v1433, 1.0
      %v1502 = vadd.f32 %v1435, 1.0
      %v1503 = vadd.f32 %v1437, 1.0
      %v1504 = vadd.f32 %v1439, 1.0
      %v1505 = vadd.f32 %v1441, 1.0
      %v1506 = vrcp.pop %v1442
      %v1507 = vrcp.pop %v1443
      %v1508 = vrcp.pop %v1444
      %v1509 = vrcp.pop %v1445
      %v1510 = vrcp.pop %v1446
      %v1511 = vrcp.pop %v1447
      %v1512 = vrcp.pop %v1448
      %v1513 = vrcp.pop %v1449
      %v1514 = vrcp.pop %v1450
      %v1515 = vrcp.pop %v1451
      %v1516 = vrcp.pop %v1452
      %v1517 = vrcp.pop %v1453
      %v1518 = vrcp.pop %v1454
      %v1519 = vrcp.pop %v1455
      %v1520 = vrcp.pop %v1456
      %v1521 = vrcp.pop %v1457
      %v1522 = vrcp.pop %v1458
      %v1523 = vrcp.pop %v1459
      %v1524 = vrcp.pop %v1460
      %v1525 = vrcp.pop %v1461
      %v1526 = vrcp.pop %v1462
      %v1527 = vrcp.pop %v1463
      %v1528 = vrcp.pop %v1464
      %v1529 = vrcp.pop %v1465
      %v1530 = vrcp.pop %v1466
      %v1531 = vrcp.pop %v1467
      %v1532 = vrcp.pop %v1468
      %v1533 = vrcp.pop %v1469
      %v1534 = vrcp.pop %v1470
      %v1535 = vrcp.pop %v1471
      %v1536 = vrcp.pop %v1472
      %v1537 = vrcp.pop %v1473
      %v1538 = vrcp.pop %v1474
      %v1539 = vrcp.pop %v1475
      %v1540 = vrcp.pop %v1476
      %v1541 = vrcp.pop %v1477
      %v1542 = vrcp.pop %v1478
      %v1543 = vrcp.pop %v1479
      %v1544 = vrcp.pop %v1480
      %v1545 = vrcp.pop %v1481
      %v1546 = vrcp.pop %v1482
      %v1547 = vrcp.pop %v1483
      %v1548 = vrcp.pop %v1484
      %v1549 = vrcp.pop %v1485
      %v1550 = vrcp.pop %v1486
      %v1551 = vrcp.pop %v1487
      %v1552 = vrcp.pop %v1488
      %v1553 = vrcp.pop %v1489
      %v1554 = vrcp.pop %v1490
      %v1555 = vrcp.pop %v1491
      %v1556 = vrcp.pop %v1492
      %v1557 = vrcp.pop %v1493
      %v1558 = vrcp.pop %v1494
      %v1559 = vrcp.pop %v1495
      %v1560 = vrcp.pop %v1496
      %v1561 = vrcp.pop %v1497
      %v1562 = vrcp.pop %v1498
      %v1563 = vrcp.pop %v1499
      %v1564 = vrcp.pop %v1500
      %v1565 = vrcp.pop %v1501
      %v1566 = vrcp.pop %v1502
      %v1567 = vrcp.pop %v1503
      %v1568 = vrcp.pop %v1504
      %v1569 = vrcp.pop %v1505
      %v1570 = vmul.f32 %v1506, 2.0
      %v1571 = vmul.f32 %v1507, 2.0
      %v1572 = vmul.f32 %v1508, 2.0
      %v1573 = vmul.f32 %v1509, 2.0
      %v1574 = vmul.f32 %v1510, 2.0
      %v1575 = vmul.f32 %v1511, 2.0
      %v1576 = vmul.f32 %v1512, 2.0
      %v1577 = vmul.f32 %v1513, 2.0
      %v1578 = vmul.f32 %v1514, 2.0
      %v1579 = vmul.f32 %v1515, 2.0
      %v1580 = vmul.f32 %v1516, 2.0
      %v1581 = vmul.f32 %v1517, 2.0
      %v1582 = vmul.f32 %v1518, 2.0
      %v1583 = vmul.f32 %v1519, 2.0
      %v1584 = vmul.f32 %v1520, 2.0
      %v1585 = vmul.f32 %v1521, 2.0
      %v1586 = vmul.f32 %v1522, 2.0
      %v1587 = vmul.f32 %v1523, 2.0
      %v1588 = vmul.f32 %v1524, 2.0
      %v1589 = vmul.f32 %v1525, 2.0
      %v1590 = vmul.f32 %v1526, 2.0
      %v1591 = vmul.f32 %v1527, 2.0
      %v1592 = vmul.f32 %v1528, 2.0
      %v1593 = vmul.f32 %v1529, 2.0
      %v1594 = vmul.f32 %v1530, 2.0
      %v1595 = vmul.f32 %v1531, 2.0
      %v1596 = vmul.f32 %v1532, 2.0
      %v1597 = vmul.f32 %v1533, 2.0
      %v1598 = vmul.f32 %v1534, 2.0
      %v1599 = vmul.f32 %v1535, 2.0
      %v1600 = vmul.f32 %v1536, 2.0
      %v1601 = vmul.f32 %v1537, 2.0
      %v1602 = vmul.f32 %v1538, 2.0
      %v1603 = vmul.f32 %v1539, 2.0
      %v1604 = vmul.f32 %v1540, 2.0
      %v1605 = vmul.f32 %v1541, 2.0
      %v1606 = vmul.f32 %v1542, 2.0
      %v1607 = vmul.f32 %v1543, 2.0
      %v1608 = vmul.f32 %v1544, 2.0
      %v1609 = vmul.f32 %v1545, 2.0
      %v1610 = vmul.f32 %v1546, 2.0
      %v1611 = vmul.f32 %v1547, 2.0
      %v1612 = vmul.f32 %v1548, 2.0
      %v1613 = vmul.f32 %v1549, 2.0
      %v1614 = vmul.f32 %v1550, 2.0
      %v1615 = vmul.f32 %v1551, 2.0
      %v1616 = vmul.f32 %v1552, 2.0
      %v1617 = vmul.f32 %v1553, 2.0
      %v1618 = vmul.f32 %v1554, 2.0
      %v1619 = vmul.f32 %v1555, 2.0
      %v1620 = vmul.f32 %v1556, 2.0
      %v1621 = vmul.f32 %v1557, 2.0
      %v1622 = vmul.f32 %v1558, 2.0
      %v1623 = vmul.f32 %v1559, 2.0
      %v1624 = vmul.f32 %v1560, 2.0
      %v1625 = vmul.f32 %v1561, 2.0
      %v1626 = vmul.f32 %v1562, 2.0
      %v1627 = vmul.f32 %v1563, 2.0
      %v1628 = vmul.f32 %v1564, 2.0
      %v1629 = vmul.f32 %v1565, 2.0
      %v1630 = vmul.f32 %v1566, 2.0
      %v1631 = vmul.f32 %v1567, 2.0
      %v1632 = vmul.f32 %v1568, 2.0
      %v1633 = vmul.f32 %v1569, 2.0
      %v1634 = vsub.f32 %v1570, 1.0
      %v1635 = vsub.f32 %v1571, 1.0
      %v1636 = vsub.f32 %v1572, 1.0
      %v1637 = vsub.f32 %v1573, 1.0
      %v1638 = vsub.f32 %v1574, 1.0
      %v1639 = vsub.f32 %v1575, 1.0
      %v1640 = vsub.f32 %v1576, 1.0
      %v1641 = vsub.f32 %v1577, 1.0
      %v1642 = vsub.f32 %v1578, 1.0
      %v1643 = vsub.f32 %v1579, 1.0
      %v1644 = vsub.f32 %v1580, 1.0
      %v1645 = vsub.f32 %v1581, 1.0
      %v1646 = vsub.f32 %v1582, 1.0
      %v1647 = vsub.f32 %v1583, 1.0
      %v1648 = vsub.f32 %v1584, 1.0
      %v1649 = vsub.f32 %v1585, 1.0
      %v1650 = vsub.f32 %v1586, 1.0
      %v1651 = vsub.f32 %v1587, 1.0
      %v1652 = vsub.f32 %v1588, 1.0
      %v1653 = vsub.f32 %v1589, 1.0
      %v1654 = vsub.f32 %v1590, 1.0
      %v1655 = vsub.f32 %v1591, 1.0
      %v1656 = vsub.f32 %v1592, 1.0
      %v1657 = vsub.f32 %v1593, 1.0
      %v1658 = vsub.f32 %v1594, 1.0
      %v1659 = vsub.f32 %v1595, 1.0
      %v1660 = vsub.f32 %v1596, 1.0
      %v1661 = vsub.f32 %v1597, 1.0
      %v1662 = vsub.f32 %v1598, 1.0
      %v1663 = vsub.f32 %v1599, 1.0
      %v1664 = vsub.f32 %v1600, 1.0
      %v1665 = vsub.f32 %v1601, 1.0
      %v1666 = vsub.f32 %v1602, 1.0
      %v1667 = vsub.f32 %v1603, 1.0
      %v1668 = vsub.f32 %v1604, 1.0
      %v1669 = vsub.f32 %v1605, 1.0
      %v1670 = vsub.f32 %v1606, 1.0
      %v1671 = vsub.f32 %v1607, 1.0
      %v1672 = vsub.f32 %v1608, 1.0
      %v1673 = vsub.f32 %v1609, 1.0
      %v1674 = vsub.f32 %v1610, 1.0
      %v1675 = vsub.f32 %v1611, 1.0
      %v1676 = vsub.f32 %v1612, 1.0
      %v1677 = vsub.f32 %v1613, 1.0
      %v1678 = vsub.f32 %v1614, 1.0
      %v1679 = vsub.f32 %v1615, 1.0
      %v1680 = vsub.f32 %v1616, 1.0
      %v1681 = vsub.f32 %v1617, 1.0
      %v1682 = vsub.f32 %v1618, 1.0
      %v1683 = vsub.f32 %v1619, 1.0
      %v1684 = vsub.f32 %v1620, 1.0
      %v1685 = vsub.f32 %v1621, 1.0
      %v1686 = vsub.f32 %v1622, 1.0
      %v1687 = vsub.f32 %v1623, 1.0
      %v1688 = vsub.f32 %v1624, 1.0
      %v1689 = vsub.f32 %v1625, 1.0
      %v1690 = vsub.f32 %v1626, 1.0
      %v1691 = vsub.f32 %v1627, 1.0
      %v1692 = vsub.f32 %v1628, 1.0
      %v1693 = vsub.f32 %v1629, 1.0
      %v1694 = vsub.f32 %v1630, 1.0
      %v1695 = vsub.f32 %v1631, 1.0
      %v1696 = vsub.f32 %v1632, 1.0
      %v1697 = vsub.f32 %v1633, 1.0
      %vm1698 = vcmask 23552
      %1699 = vst.msk [vmem:[%s172] sm:$0xff] %vm1698, %v1634
      %1700 = vst.msk [vmem:[%s172 + $0x8] sm:$0xff] %vm1698, %v1635
      %1701 = vst.msk [vmem:[%s172 + $0x10] sm:$0xff] %vm1698, %v1636
      %1702 = vst.msk [vmem:[%s172 + $0x18] sm:$0xff] %vm1698, %v1637
      %1703 = vst.msk [vmem:[%s172 + $0x20] sm:$0xff] %vm1698, %v1638
      %1704 = vst.msk [vmem:[%s172 + $0x28] sm:$0xff] %vm1698, %v1639
      %1705 = vst.msk [vmem:[%s172 + $0x30] sm:$0xff] %vm1698, %v1640
      %1706 = vst.msk [vmem:[%s172 + $0x38] sm:$0xff] %vm1698, %v1641
      %1707 = vst.msk [vmem:[%s172 + $0x40] sm:$0xff] %vm1698, %v1642
      %1708 = vst.msk [vmem:[%s172 + $0x48] sm:$0xff] %vm1698, %v1643
      %1709 = vst.msk [vmem:[%s172 + $0x50] sm:$0xff] %vm1698, %v1644
      %1710 = vst.msk [vmem:[%s172 + $0x58] sm:$0xff] %vm1698, %v1645
      %1711 = vst.msk [vmem:[%s172 + $0x60] sm:$0xff] %vm1698, %v1646
      %1712 = vst.msk [vmem:[%s172 + $0x68] sm:$0xff] %vm1698, %v1647
      %1713 = vst.msk [vmem:[%s172 + $0x70] sm:$0xff] %vm1698, %v1648
      %1714 = vst.msk [vmem:[%s172 + $0x78] sm:$0xff] %vm1698, %v1649
      %1715 = vst.msk [vmem:[%s172 + $0x80] sm:$0xff] %vm1698, %v1650
      %1716 = vst.msk [vmem:[%s172 + $0x88] sm:$0xff] %vm1698, %v1651
      %1717 = vst.msk [vmem:[%s172 + $0x90] sm:$0xff] %vm1698, %v1652
      %1718 = vst.msk [vmem:[%s172 + $0x98] sm:$0xff] %vm1698, %v1653
      %1719 = vst.msk [vmem:[%s172 + $0xa0] sm:$0xff] %vm1698, %v1654
      %1720 = vst.msk [vmem:[%s172 + $0xa8] sm:$0xff] %vm1698, %v1655
      %1721 = vst.msk [vmem:[%s172 + $0xb0] sm:$0xff] %vm1698, %v1656
      %1722 = vst.msk [vmem:[%s172 + $0xb8] sm:$0xff] %vm1698, %v1657
      %1723 = vst.msk [vmem:[%s172 + $0xc0] sm:$0xff] %vm1698, %v1658
      %1724 = vst.msk [vmem:[%s172 + $0xc8] sm:$0xff] %vm1698, %v1659
      %1725 = vst.msk [vmem:[%s172 + $0xd0] sm:$0xff] %vm1698, %v1660
      %1726 = vst.msk [vmem:[%s172 + $0xd8] sm:$0xff] %vm1698, %v1661
      %1727 = vst.msk [vmem:[%s172 + $0xe0] sm:$0xff] %vm1698, %v1662
      %1728 = vst.msk [vmem:[%s172 + $0xe8] sm:$0xff] %vm1698, %v1663
      %1729 = vst.msk [vmem:[%s172 + $0xf0] sm:$0xff] %vm1698, %v1664
      %1730 = vst.msk [vmem:[%s172 + $0xf8] sm:$0xff] %vm1698, %v1665
      %1731 = vst.msk [vmem:[%s172 + $0x100] sm:$0xff] %vm1698, %v1666
      %1732 = vst.msk [vmem:[%s172 + $0x108] sm:$0xff] %vm1698, %v1667
      %1733 = vst.msk [vmem:[%s172 + $0x110] sm:$0xff] %vm1698, %v1668
      %1734 = vst.msk [vmem:[%s172 + $0x118] sm:$0xff] %vm1698, %v1669
      %1735 = vst.msk [vmem:[%s172 + $0x120] sm:$0xff] %vm1698, %v1670
      %1736 = vst.msk [vmem:[%s172 + $0x128] sm:$0xff] %vm1698, %v1671
      %1737 = vst.msk [vmem:[%s172 + $0x130] sm:$0xff] %vm1698, %v1672
      %1738 = vst.msk [vmem:[%s172 + $0x138] sm:$0xff] %vm1698, %v1673
      %1739 = vst.msk [vmem:[%s172 + $0x140] sm:$0xff] %vm1698, %v1674
      %1740 = vst.msk [vmem:[%s172 + $0x148] sm:$0xff] %vm1698, %v1675
      %1741 = vst.msk [vmem:[%s172 + $0x150] sm:$0xff] %vm1698, %v1676
      %1742 = vst.msk [vmem:[%s172 + $0x158] sm:$0xff] %vm1698, %v1677
      %1743 = vst.msk [vmem:[%s172 + $0x160] sm:$0xff] %vm1698, %v1678
      %1744 = vst.msk [vmem:[%s172 + $0x168] sm:$0xff] %vm1698, %v1679
      %1745 = vst.msk [vmem:[%s172 + $0x170] sm:$0xff] %vm1698, %v1680
      %1746 = vst.msk [vmem:[%s172 + $0x178] sm:$0xff] %vm1698, %v1681
      %1747 = vst.msk [vmem:[%s172 + $0x180] sm:$0xff] %vm1698, %v1682
      %1748 = vst.msk [vmem:[%s172 + $0x188] sm:$0xff] %vm1698, %v1683
      %1749 = vst.msk [vmem:[%s172 + $0x190] sm:$0xff] %vm1698, %v1684
      %1750 = vst.msk [vmem:[%s172 + $0x198] sm:$0xff] %vm1698, %v1685
      %1751 = vst.msk [vmem:[%s172 + $0x1a0] sm:$0xff] %vm1698, %v1686
      %1752 = vst.msk [vmem:[%s172 + $0x1a8] sm:$0xff] %vm1698, %v1687
      %1753 = vst.msk [vmem:[%s172 + $0x1b0] sm:$0xff] %vm1698, %v1688
      %1754 = vst.msk [vmem:[%s172 + $0x1b8] sm:$0xff] %vm1698, %v1689
      %1755 = vst.msk [vmem:[%s172 + $0x1c0] sm:$0xff] %vm1698, %v1690
      %1756 = vst.msk [vmem:[%s172 + $0x1c8] sm:$0xff] %vm1698, %v1691
      %1757 = vst.msk [vmem:[%s172 + $0x1d0] sm:$0xff] %vm1698, %v1692
      %1758 = vst.msk [vmem:[%s172 + $0x1d8] sm:$0xff] %vm1698, %v1693
      %1759 = vst.msk [vmem:[%s172 + $0x1e0] sm:$0xff] %vm1698, %v1694
      %1760 = vst.msk [vmem:[%s172 + $0x1e8] sm:$0xff] %vm1698, %v1695
      %1761 = vst.msk [vmem:[%s172 + $0x1f0] sm:$0xff] %vm1698, %v1696
      %1762 = vst.msk [vmem:[%s172 + $0x1f8] sm:$0xff] %vm1698, %v1697
      %s1763 = smul.u32 64, %s14
      %p1764 = scmp.lt.s32.totalorder %s1763, 255
      %s1765 = scalar_select %p1764, %s1763, 255
      %s1766 = smul.addr %s1765, 8
      %s1767 = scalar_lea.vmem %s3, %s1766
      // Predicated region
      $region33: #{tpu_custom_call.1} parent=31 // pred_check
        %p1768 = pneg %p100
      $region34: #{tpu_custom_call.1} parent=31 // pred_check_branch
        %1770 = sbr.rel (%p1768) target = $region36
      $region35: #{tpu_custom_call.1} parent=31 // pred_region
        %s1771 = smul.u32 64, %s14
      $region36: #{tpu_custom_call.1} parent=31 // pred_fallthru
        _
    $region32: #{tpu_custom_call.1} parent=5 // pred_fallthru
      _
    %p1772 = scmp.le.s32.totalorder 2, %s9
    // Predicated region
    $region37: #{tpu_custom_call.1} parent=5 // pred_check
      %p1773 = pneg %p1772
    $region38: #{tpu_custom_call.1} parent=5 // pred_check_branch
      %1775 = sbr.rel (%p1773) target = $region40
    $region39: #{tpu_custom_call.1} parent=5 // pred_region
      %s1776 = ssub.s32 %s9, 2
      // Predicated region
      $region41: #{tpu_custom_call.1} parent=39 // pred_check
        %p1777 = pneg %p106
      $region42: #{tpu_custom_call.1} parent=39 // pred_check_branch
        %1779 = sbr.rel (%p1777) target = $region44
      $region43: #{tpu_custom_call.1} parent=39 // pred_region
        %s1780 = smul.u32 64, %s15
        %p1781 = scmp.lt.s32.totalorder %s1780, 255
        %s1782 = scalar_select %p1781, %s1780, 255
        %s1783 = smul.addr %s1782, 8
        %s1784 = scalar_lea.vmem %s3, %s1783
      $region44: #{tpu_custom_call.1} parent=39 // pred_fallthru
        _
    $region40: #{tpu_custom_call.1} parent=5 // pred_fallthru
      _
  $region6: #{tpu_custom_call.1} parent=0 // loop_footer
    %s13 = sadd.s32 1, %s9
  $region7: #{tpu_custom_call.1} parent=0 // loop_footer_branch
    %8 = sbr.rel target = $region3
  $region8: #{tpu_custom_call.1} parent=0 // loop_exit
    _

</llo_original>
